<compile_context>
chip_gen: v7x
topology: tpu7x:2x2x1
jax: 0.10.0
libtpu: 0.0.40
codegen_flags: <defaults>
</compile_context>

<pallas_src>
import jax
import jax.numpy as jnp
from jax.experimental import pallas as pl
from jax.experimental.pallas import tpu as pltpu

LANE = 128
SUBLANE = 8


def _round_up(x, m):
    return ((x + m - 1) // m) * m


# ----------------------------- Pallas kernel -------------------------------

def _make_recurrent_kernel(num_layers: int, hidden_pad: int):
    """Kernel closure for a fixed (static) number of LSTM layers; hidden_pad is a
    multiple of 128 so every gate/state slice below is lane-aligned."""
    H = hidden_pad

    def kernel(*refs):
        # inputs
        obs_ref, term_ref, hc_ref = refs[:3]
        idx = 3
        layer_params = []
        for _ in range(num_layers):
            layer_params.append((refs[idx], refs[idx + 1]))   # (w_stacked[bf16], bias[f32])
            idx += 2
        w_hid_ref, b_hid_ref, w_pol_ref, b_pol_ref = refs[idx:idx + 4]
        idx += 4
        # outputs
        out_ref, hc_out_ref = refs[idx:idx + 2]

        mask = 1.0 - term_ref[...]                    # (bt, 1): reset state where terminal
        x = obs_ref[...]                              # (bt, In_pad) f32

        for layer in range(num_layers):
            w_ref, b_ref = layer_params[layer]
            hc_l = hc_ref[layer]                      # (bt, 2*H) f32
            h_prev = hc_l[:, :H] * mask               # lane-aligned slices
            c_prev = hc_l[:, H:] * mask

            # Single fused MXU matmul over K = In_pad + H (or 2H): bf16 x bf16 -> f32 acc.
            xh = jnp.concatenate([x, h_prev], axis=-1).astype(jnp.bfloat16)
            gates = (
                jnp.dot(xh, w_ref[...], preferred_element_type=jnp.float32)
                + b_ref[...]                          # (1, 4H) f32 broadcast over batch
            )                                         # (bt, 4H) f32

            # Activate the full gate tensor once, slice afterwards (gate order i, f, g, o).
            sig = jax.nn.sigmoid(gates)
            tan = jnp.tanh(gates)
            i_g = sig[:, 0 * H:1 * H]
            f_g = sig[:, 1 * H:2 * H]
            g_g = tan[:, 2 * H:3 * H]
            o_g = sig[:, 3 * H:4 * H]

            c_new = f_g * c_prev + i_g * g_g          # f32 element-wise math
            h_new = o_g * jnp.tanh(c_new)

            # Single lane-dense (bt, 2H) store of the packed state.
            hc_out_ref[layer] = jnp.concatenate([h_new, c_new], axis=-1)
            x = h_new                                 # input to next layer

        # hidden_layer + tanh activation
        hid = jnp.tanh(
            jnp.dot(x.astype(jnp.bfloat16), w_hid_ref[...],
                    preferred_element_type=jnp.float32)
            + b_hid_ref[...]
        )
        # policy_layer_logits
        out_ref[...] = (
            jnp.dot(hid.astype(jnp.bfloat16), w_pol_ref[...],
                    preferred_element_type=jnp.float32)
            + b_pol_ref[...]
        )

    return kernel


# ------------------------------- wrapper ------------------------------------

def recurrent_net_forward(obs, terminal, h0, c0, packed, *,
                          input_size, hidden_size, output_size, num_layers,
                          batch_tile=8):
    """Full forward pass in one pallas_call.

    Returns (logits, h_new, c_new) — logits matches RecurrentNet.forward(),
    (h_new, c_new) matches the updated self.hidden_cell.
    """
    batch = obs.shape[0]
    H = hidden_size
    H_pad = _round_up(H, LANE)
    In_pad = _round_up(input_size, LANE)
    Out_pad = _round_up(output_size, LANE)
    B_pad = _round_up(max(batch, batch_tile), batch_tile)
    n_tiles = B_pad // batch_tile

    # Pad to lane/sublane-aligned shapes (padded weights/biases are zero, so padded
    # state/logit regions stay exactly zero across steps).
    obs_p = jnp.zeros((B_pad, In_pad), jnp.float32).at[:batch, :input_size].set(obs)
    term_p = jnp.zeros((B_pad, 1), jnp.float32).at[:batch].set(terminal)
    hc = jnp.zeros((num_layers, B_pad, 2 * H_pad), jnp.float32)
    hc = hc.at[:, :batch, :H].set(h0)
    hc = hc.at[:, :batch, H_pad:H_pad + H].set(c0)

    const2d = lambda i: (0, 0)   # weights stay VMEM-resident across batch tiles

    inputs = [obs_p, term_p, hc]
    in_specs = [
        pl.BlockSpec((batch_tile, In_pad), lambda i: (i, 0)),
        pl.BlockSpec((batch_tile, 1), lambda i: (i, 0)),
        pl.BlockSpec((num_layers, batch_tile, 2 * H_pad), lambda i: (0, i, 0)),
    ]
    for layer in range(num_layers):
        w = packed[f"w_{layer}"]
        b = packed[f"b_{layer}"]
        inputs += [w, b]
        in_specs += [pl.BlockSpec(w.shape, const2d), pl.BlockSpec(b.shape, const2d)]
    for name in ("w_hid", "b_hid", "w_pol", "b_pol"):
        arr = packed[name]
        inputs.append(arr)
        in_specs.append(pl.BlockSpec(arr.shape, const2d))

    out_shapes = (
        jax.ShapeDtypeStruct((B_pad, Out_pad), jnp.float32),
        jax.ShapeDtypeStruct((num_layers, B_pad, 2 * H_pad), jnp.float32),
    )
    out_specs = (
        pl.BlockSpec((batch_tile, Out_pad), lambda i: (i, 0)),
        pl.BlockSpec((num_layers, batch_tile, 2 * H_pad), lambda i: (0, i, 0)),
    )

    kernel = _make_recurrent_kernel(num_layers, H_pad)

    logits_p, hc_new = pl.pallas_call(
        kernel,
        out_shape=out_shapes,
        grid_spec=pltpu.PrefetchScalarGridSpec(
            num_scalar_prefetch=0,
            grid=(n_tiles,),
            in_specs=in_specs,
            out_specs=out_specs,
        ),
        # state (input index 2) is overwritten in place into output index 1
        input_output_aliases={2: 1},
        compiler_params=pltpu.CompilerParams(
            dimension_semantics=("parallel",)),
    )(*inputs)

    logits = logits_p[:batch, :output_size]
    h_new = hc_new[:, :batch, :H]
    c_new = hc_new[:, :batch, H_pad:H_pad + H]
    return logits, h_new, c_new


# ----------------------- deterministic parameter init ----------------------

def _orthogonal(key, shape, gain):
    """PyTorch-style orthogonal init (semi-orthogonal for non-square)."""
    rows, cols = shape
    n, m = max(rows, cols), min(rows, cols)
    a = jax.random.normal(key, (n, m), dtype=jnp.float32)
    q, r = jnp.linalg.qr(a)
    q = q * jnp.sign(jnp.diag(r))[None, :]
    if rows < cols:
        q = q.T
    return gain * q


def make_params(key, input_size, hidden_size, output_size, num_layers, init_scale):
    """Logical (unpadded, f32) parameters, matching the PyTorch module's init."""
    params = {}
    keys = jax.random.split(key, 2 * num_layers + 2)
    k_idx = 0
    for layer in range(num_layers):
        in_sz = input_size if layer == 0 else hidden_size
        # PyTorch layout is (4H, in); transpose for x @ W in the kernel.
        w_ih = _orthogonal(keys[k_idx], (4 * hidden_size, in_sz), init_scale); k_idx += 1
        w_hh = _orthogonal(keys[k_idx], (4 * hidden_size, hidden_size), init_scale); k_idx += 1
        params[f"w_ih_{layer}"] = w_ih.T
        params[f"w_hh_{layer}"] = w_hh.T
        # LSTM biases: nn.init.constant(param, 1.0) for both b_ih and b_hh -> combined 2.0
        params[f"b_{layer}"] = jnp.full((1, 4 * hidden_size), 2.0, dtype=jnp.float32)
    params["w_hid"] = _orthogonal(keys[k_idx], (hidden_size, hidden_size), init_scale).T; k_idx += 1
    params["b_hid"] = jnp.zeros((1, hidden_size), dtype=jnp.float32)
    params["w_pol"] = _orthogonal(keys[k_idx], (output_size, hidden_size), init_scale).T; k_idx += 1
    params["b_pol"] = jnp.zeros((1, output_size), dtype=jnp.float32)
    return params


def pack_params(params, input_size, hidden_size, output_size, num_layers):
    """Pack to the kernel layout: per-layer stacked [w_ih; w_hh] with each gate's
    output padded to a 128-lane-aligned slab; weights bf16, biases f32."""
    H = hidden_size
    H_pad = _round_up(H, LANE)
    In_pad = _round_up(input_size, LANE)
    Out_pad = _round_up(output_size, LANE)
    packed = {}
    for layer in range(num_layers):
        in_sz = input_size if layer == 0 else hidden_size
        in_off = In_pad if layer == 0 else H_pad          # row offset of the w_hh block
        K = in_off + H_pad
        w = jnp.zeros((K, 4 * H_pad), jnp.float32)
        b = jnp.zeros((1, 4 * H_pad), jnp.float32)
        w_ih = params[f"w_ih_{layer}"]                    # (in_sz, 4H)
        w_hh = params[f"w_hh_{layer}"]                    # (H, 4H)
        bias = params[f"b_{layer}"]                       # (1, 4H)
        for g in range(4):
            w = w.at[:in_sz, g * H_pad:g * H_pad + H].set(w_ih[:, g * H:(g + 1) * H])
            w = w.at[in_off:in_off + H, g * H_pad:g * H_pad + H].set(w_hh[:, g * H:(g + 1) * H])
            b = b.at[:, g * H_pad:g * H_pad + H].set(bias[:, g * H:(g + 1) * H])
        packed[f"w_{layer}"] = w.astype(jnp.bfloat16)
        packed[f"b_{layer}"] = b
    packed["w_hid"] = (jnp.zeros((H_pad, H_pad), jnp.float32)
                       .at[:H, :H].set(params["w_hid"])).astype(jnp.bfloat16)
    packed["b_hid"] = jnp.zeros((1, H_pad), jnp.float32).at[:, :H].set(params["b_hid"])
    packed["w_pol"] = (jnp.zeros((H_pad, Out_pad), jnp.float32)
                       .at[:H, :output_size].set(params["w_pol"])).astype(jnp.bfloat16)
    packed["b_pol"] = jnp.zeros((1, Out_pad), jnp.float32).at[:, :output_size].set(params["b_pol"])
    return packed


# ------------------------------- reference ---------------------------------

def reference_forward(obs, terminal, h0, c0, params, num_layers):
    """Pure-JAX reference mirroring the kernel's bf16-operand / f32-accumulate matmuls."""
    def mm(a, w):
        a16 = a.astype(jnp.bfloat16).astype(jnp.float32)
        w16 = w.astype(jnp.bfloat16).astype(jnp.float32)
        return jnp.dot(a16, w16, precision=jax.lax.Precision.HIGHEST)

    mask = 1.0 - terminal
    x = obs
    h_out, c_out = [], []
    for layer in range(num_layers):
        h_prev = h0[layer] * mask
        c_prev = c0[layer] * mask
        gates = (mm(x, params[f"w_ih_{layer}"]) + mm(h_prev, params[f"w_hh_{layer}"])
                 + params[f"b_{layer}"])
        hidden = h_prev.shape[-1]
        i_g = jax.nn.sigmoid(gates[:, 0 * hidden:1 * hidden])
        f_g = jax.nn.sigmoid(gates[:, 1 * hidden:2 * hidden])
        g_g = jnp.tanh(gates[:, 2 * hidden:3 * hidden])
        o_g = jax.nn.sigmoid(gates[:, 3 * hidden:4 * hidden])
        c_new = f_g * c_prev + i_g * g_g
        h_new = o_g * jnp.tanh(c_new)
        h_out.append(h_new); c_out.append(c_new)
        x = h_new
    hid = jnp.tanh(mm(x, params["w_hid"]) + params["b_hid"])
    logits = mm(hid, params["w_pol"]) + params["b_pol"]
    return logits, jnp.stack(h_out), jnp.stack(c_out)


# --------------------------------- main -------------------------------------

if __name__ == "__main__":
    batch = 2
    input_size = 16
    hidden_size = 32
    output_size = 8
    num_layers = 2
    init_scale = 1.0

    key = jax.random.PRNGKey(0)
    k_param, k_obs, k_h, k_c = jax.random.split(key, 4)

    params = make_params(k_param, input_size, hidden_size, output_size, num_layers, init_scale)
    packed = pack_params(params, input_size, hidden_size, output_size, num_layers)

    obs = jax.random.normal(k_obs, (batch, input_size), dtype=jnp.float32)
    # one env just terminated, one did not (exercise the (1 - terminal) state reset)
    terminal = jnp.array([[1.0], [0.0]], dtype=jnp.float32)           # (B, 1)
    # nonzero carried-over hidden state (as if from a previous step)
    h0 = 0.1 * jax.random.normal(k_h, (num_layers, batch, hidden_size), dtype=jnp.float32)
    c0 = 0.1 * jax.random.normal(k_c, (num_layers, batch, hidden_size), dtype=jnp.float32)

    logits, h_new, c_new = recurrent_net_forward(
        obs, terminal, h0, c0, packed,
        input_size=input_size, hidden_size=hidden_size,
        output_size=output_size, num_layers=num_layers)
    jax.block_until_ready((logits, h_new, c_new))

    ref_logits, ref_h, ref_c = reference_forward(obs, terminal, h0, c0, params, num_layers)
    # bf16 MXU operands -> tolerance loosened vs. the pure-f32 version
    assert jnp.allclose(logits, ref_logits, atol=1e-3, rtol=1e-3), "logits mismatch"
    assert jnp.allclose(h_new, ref_h, atol=1e-3, rtol=1e-3), "h state mismatch"
    assert jnp.allclose(c_new, ref_c, atol=1e-3, rtol=1e-3), "c state mismatch"

    print("KERNEL_OK")
</pallas_src>

<mosaic_0001>
module attributes {stable_mosaic.version = 11 : i64} {
  func.func @kernel(%arg0: i32, %arg1: memref<8x128xf32, #tpu.memory_space<vmem>>, %arg2: memref<8x1xf32, #tpu.memory_space<vmem>>, %arg3: memref<2x8x256xf32, #tpu.memory_space<vmem>>, %arg4: memref<256x512xbf16, #tpu.memory_space<vmem>>, %arg5: memref<1x512xf32, #tpu.memory_space<vmem>>, %arg6: memref<256x512xbf16, #tpu.memory_space<vmem>>, %arg7: memref<1x512xf32, #tpu.memory_space<vmem>>, %arg8: memref<128x128xbf16, #tpu.memory_space<vmem>>, %arg9: memref<1x128xf32, #tpu.memory_space<vmem>>, %arg10: memref<128x128xbf16, #tpu.memory_space<vmem>>, %arg11: memref<1x128xf32, #tpu.memory_space<vmem>>, %arg12: memref<8x128xf32, #tpu.memory_space<vmem>>, %arg13: memref<2x8x256xf32, #tpu.memory_space<vmem>>) attributes {dimension_semantics = [#tpu.dimension_semantics<parallel>], iteration_bounds = array<i64: 1>, scalar_prefetch = 0 : i64, scratch_operands = 0 : i64, tpu.core_type = #tpu.core_type<tc>, window_params = [{transform_indices = @transform_0, window_bounds = array<i64: 8, 128>}, {transform_indices = @transform_1, window_bounds = array<i64: 8, 1>}, {transform_indices = @transform_2, window_bounds = array<i64: 2, 8, 256>}, {pipeline_mode = #tpu.pipeline_mode<synchronous>, transform_indices = @transform_3, window_bounds = array<i64: 256, 512>}, {pipeline_mode = #tpu.pipeline_mode<synchronous>, transform_indices = @transform_4, window_bounds = array<i64: 1, 512>}, {pipeline_mode = #tpu.pipeline_mode<synchronous>, transform_indices = @transform_5, window_bounds = array<i64: 256, 512>}, {pipeline_mode = #tpu.pipeline_mode<synchronous>, transform_indices = @transform_6, window_bounds = array<i64: 1, 512>}, {pipeline_mode = #tpu.pipeline_mode<synchronous>, transform_indices = @transform_7, window_bounds = array<i64: 128, 128>}, {pipeline_mode = #tpu.pipeline_mode<synchronous>, transform_indices = @transform_8, window_bounds = array<i64: 1, 128>}, {pipeline_mode = #tpu.pipeline_mode<synchronous>, transform_indices = @transform_9, window_bounds = array<i64: 128, 128>}, {pipeline_mode = #tpu.pipeline_mode<synchronous>, transform_indices = @transform_10, window_bounds = array<i64: 1, 128>}, {transform_indices = @transform_11, window_bounds = array<i64: 8, 128>}, {transform_indices = @transform_12, window_bounds = array<i64: 2, 8, 256>}]} {
    %c0 = arith.constant 0 : index
    %c0_0 = arith.constant 0 : index
    %0 = vector.load %arg2[%c0, %c0_0] : memref<8x1xf32, #tpu.memory_space<vmem>>, vector<8x1xf32>
    %cst = arith.constant 1.000000e+00 : f32
    %1 = vector.broadcast %cst : f32 to vector<8x1xf32>
    %2 = arith.subf %1, %0 : vector<8x1xf32>
    %c0_1 = arith.constant 0 : index
    %c0_2 = arith.constant 0 : index
    %3 = vector.load %arg1[%c0_1, %c0_2] : memref<8x128xf32, #tpu.memory_space<vmem>>, vector<8x128xf32>
    %c0_3 = arith.constant 0 : index
    %c0_4 = arith.constant 0 : index
    %c0_5 = arith.constant 0 : index
    %4 = vector.load %arg3[%c0_3, %c0_4, %c0_5] : memref<2x8x256xf32, #tpu.memory_space<vmem>>, vector<1x8x256xf32>
    %5 = vector.shape_cast %4 : vector<1x8x256xf32> to vector<8x256xf32>
    %6 = vector.extract_strided_slice %5 {offsets = [0, 0], sizes = [8, 128], strides = [1, 1]} : vector<8x256xf32> to vector<8x128xf32>
    %7 = vector.broadcast %2 : vector<8x1xf32> to vector<8x128xf32>
    %8 = arith.mulf %6, %7 : vector<8x128xf32>
    %9 = vector.extract_strided_slice %5 {offsets = [0, 128], sizes = [8, 128], strides = [1, 1]} : vector<8x256xf32> to vector<8x128xf32>
    %10 = vector.broadcast %2 : vector<8x1xf32> to vector<8x128xf32>
    %11 = arith.mulf %9, %10 : vector<8x128xf32>
    %12 = tpu.concatenate %3, %8 in 1 : vector<8x128xf32>, vector<8x128xf32> -> vector<8x256xf32>
    %13 = arith.truncf %12 : vector<8x256xf32> to vector<8x256xbf16>
    %c0_6 = arith.constant 0 : index
    %c0_7 = arith.constant 0 : index
    %14 = vector.load %arg4[%c0_6, %c0_7] : memref<256x512xbf16, #tpu.memory_space<vmem>>, vector<256x512xbf16>
    %cst_8 = arith.constant dense<0.000000e+00> : vector<8x512xf32>
    %15 = tpu.matmul %13, %14, %cst_8 {dimension_numbers = #tpu.dot_dimension_numbers<[1], [0], [0], [1], [0, 0, 1, 1], [], []>} : vector<8x256xbf16>, vector<256x512xbf16>, vector<8x512xf32> -> vector<8x512xf32>
    %c0_9 = arith.constant 0 : index
    %c0_10 = arith.constant 0 : index
    %16 = vector.load %arg5[%c0_9, %c0_10] : memref<1x512xf32, #tpu.memory_space<vmem>>, vector<1x512xf32>
    %17 = vector.broadcast %16 : vector<1x512xf32> to vector<8x512xf32>
    %18 = arith.addf %15, %17 : vector<8x512xf32>
    %19 = arith.negf %18 : vector<8x512xf32>
    %20 = math.exp %19 : vector<8x512xf32>
    %cst_11 = arith.constant 1.000000e+00 : f32
    %21 = vector.broadcast %cst_11 : f32 to vector<8x512xf32>
    %22 = arith.addf %21, %20 : vector<8x512xf32>
    %23 = arith.divf %21, %22 : vector<8x512xf32>
    %24 = math.tanh %18 : vector<8x512xf32>
    %25 = vector.extract_strided_slice %23 {offsets = [0, 0], sizes = [8, 128], strides = [1, 1]} : vector<8x512xf32> to vector<8x128xf32>
    %26 = vector.extract_strided_slice %23 {offsets = [0, 128], sizes = [8, 128], strides = [1, 1]} : vector<8x512xf32> to vector<8x128xf32>
    %27 = vector.extract_strided_slice %24 {offsets = [0, 256], sizes = [8, 128], strides = [1, 1]} : vector<8x512xf32> to vector<8x128xf32>
    %28 = vector.extract_strided_slice %23 {offsets = [0, 384], sizes = [8, 128], strides = [1, 1]} : vector<8x512xf32> to vector<8x128xf32>
    %29 = arith.mulf %26, %11 : vector<8x128xf32>
    %30 = arith.mulf %25, %27 : vector<8x128xf32>
    %31 = arith.addf %29, %30 : vector<8x128xf32>
    %32 = math.tanh %31 : vector<8x128xf32>
    %33 = arith.mulf %28, %32 : vector<8x128xf32>
    %34 = tpu.concatenate %33, %31 in 1 : vector<8x128xf32>, vector<8x128xf32> -> vector<8x256xf32>
    %c0_12 = arith.constant 0 : index
    %c0_13 = arith.constant 0 : index
    %c0_14 = arith.constant 0 : index
    %35 = vector.load %arg13[%c0_12, %c0_13, %c0_14] : memref<2x8x256xf32, #tpu.memory_space<vmem>>, vector<1x8x256xf32>
    %36 = vector.shape_cast %35 : vector<1x8x256xf32> to vector<8x256xf32>
    %37 = vector.shape_cast %34 : vector<8x256xf32> to vector<1x8x256xf32>
    tpu.vector_store %arg13[%c0_12, %c0_13, %c0_14], %37 {strides = array<i32>} : memref<2x8x256xf32, #tpu.memory_space<vmem>>, vector<1x8x256xf32>,
    %c1 = arith.constant 1 : index
    %c0_15 = arith.constant 0 : index
    %c0_16 = arith.constant 0 : index
    %38 = vector.load %arg3[%c1, %c0_15, %c0_16] : memref<2x8x256xf32, #tpu.memory_space<vmem>>, vector<1x8x256xf32>
    %39 = vector.shape_cast %38 : vector<1x8x256xf32> to vector<8x256xf32>
    %40 = vector.extract_strided_slice %39 {offsets = [0, 0], sizes = [8, 128], strides = [1, 1]} : vector<8x256xf32> to vector<8x128xf32>
    %41 = vector.broadcast %2 : vector<8x1xf32> to vector<8x128xf32>
    %42 = arith.mulf %40, %41 : vector<8x128xf32>
    %43 = vector.extract_strided_slice %39 {offsets = [0, 128], sizes = [8, 128], strides = [1, 1]} : vector<8x256xf32> to vector<8x128xf32>
    %44 = vector.broadcast %2 : vector<8x1xf32> to vector<8x128xf32>
    %45 = arith.mulf %43, %44 : vector<8x128xf32>
    %46 = tpu.concatenate %33, %42 in 1 : vector<8x128xf32>, vector<8x128xf32> -> vector<8x256xf32>
    %47 = arith.truncf %46 : vector<8x256xf32> to vector<8x256xbf16>
    %c0_17 = arith.constant 0 : index
    %c0_18 = arith.constant 0 : index
    %48 = vector.load %arg6[%c0_17, %c0_18] : memref<256x512xbf16, #tpu.memory_space<vmem>>, vector<256x512xbf16>
    %cst_19 = arith.constant dense<0.000000e+00> : vector<8x512xf32>
    %49 = tpu.matmul %47, %48, %cst_19 {dimension_numbers = #tpu.dot_dimension_numbers<[1], [0], [0], [1], [0, 0, 1, 1], [], []>} : vector<8x256xbf16>, vector<256x512xbf16>, vector<8x512xf32> -> vector<8x512xf32>
    %c0_20 = arith.constant 0 : index
    %c0_21 = arith.constant 0 : index
    %50 = vector.load %arg7[%c0_20, %c0_21] : memref<1x512xf32, #tpu.memory_space<vmem>>, vector<1x512xf32>
    %51 = vector.broadcast %50 : vector<1x512xf32> to vector<8x512xf32>
    %52 = arith.addf %49, %51 : vector<8x512xf32>
    %53 = arith.negf %52 : vector<8x512xf32>
    %54 = math.exp %53 : vector<8x512xf32>
    %cst_22 = arith.constant 1.000000e+00 : f32
    %55 = vector.broadcast %cst_22 : f32 to vector<8x512xf32>
    %56 = arith.addf %55, %54 : vector<8x512xf32>
    %57 = arith.divf %55, %56 : vector<8x512xf32>
    %58 = math.tanh %52 : vector<8x512xf32>
    %59 = vector.extract_strided_slice %57 {offsets = [0, 0], sizes = [8, 128], strides = [1, 1]} : vector<8x512xf32> to vector<8x128xf32>
    %60 = vector.extract_strided_slice %57 {offsets = [0, 128], sizes = [8, 128], strides = [1, 1]} : vector<8x512xf32> to vector<8x128xf32>
    %61 = vector.extract_strided_slice %58 {offsets = [0, 256], sizes = [8, 128], strides = [1, 1]} : vector<8x512xf32> to vector<8x128xf32>
    %62 = vector.extract_strided_slice %57 {offsets = [0, 384], sizes = [8, 128], strides = [1, 1]} : vector<8x512xf32> to vector<8x128xf32>
    %63 = arith.mulf %60, %45 : vector<8x128xf32>
    %64 = arith.mulf %59, %61 : vector<8x128xf32>
    %65 = arith.addf %63, %64 : vector<8x128xf32>
    %66 = math.tanh %65 : vector<8x128xf32>
    %67 = arith.mulf %62, %66 : vector<8x128xf32>
    %68 = tpu.concatenate %67, %65 in 1 : vector<8x128xf32>, vector<8x128xf32> -> vector<8x256xf32>
    %c1_23 = arith.constant 1 : index
    %c0_24 = arith.constant 0 : index
    %c0_25 = arith.constant 0 : index
    %69 = vector.load %arg13[%c1_23, %c0_24, %c0_25] : memref<2x8x256xf32, #tpu.memory_space<vmem>>, vector<1x8x256xf32>
    %70 = vector.shape_cast %69 : vector<1x8x256xf32> to vector<8x256xf32>
    %71 = vector.shape_cast %68 : vector<8x256xf32> to vector<1x8x256xf32>
    tpu.vector_store %arg13[%c1_23, %c0_24, %c0_25], %71 {strides = array<i32>} : memref<2x8x256xf32, #tpu.memory_space<vmem>>, vector<1x8x256xf32>,
    %72 = arith.truncf %67 : vector<8x128xf32> to vector<8x128xbf16>
    %c0_26 = arith.constant 0 : index
    %c0_27 = arith.constant 0 : index
    %73 = vector.load %arg8[%c0_26, %c0_27] : memref<128x128xbf16, #tpu.memory_space<vmem>>, vector<128x128xbf16>
    %cst_28 = arith.constant dense<0.000000e+00> : vector<8x128xf32>
    %74 = tpu.matmul %72, %73, %cst_28 {dimension_numbers = #tpu.dot_dimension_numbers<[1], [0], [0], [1], [0, 0, 1, 1], [], []>} : vector<8x128xbf16>, vector<128x128xbf16>, vector<8x128xf32> -> vector<8x128xf32>
    %c0_29 = arith.constant 0 : index
    %c0_30 = arith.constant 0 : index
    %75 = vector.load %arg9[%c0_29, %c0_30] : memref<1x128xf32, #tpu.memory_space<vmem>>, vector<1x128xf32>
    %76 = vector.broadcast %75 : vector<1x128xf32> to vector<8x128xf32>
    %77 = arith.addf %74, %76 : vector<8x128xf32>
    %78 = math.tanh %77 : vector<8x128xf32>
    %79 = arith.truncf %78 : vector<8x128xf32> to vector<8x128xbf16>
    %c0_31 = arith.constant 0 : index
    %c0_32 = arith.constant 0 : index
    %80 = vector.load %arg10[%c0_31, %c0_32] : memref<128x128xbf16, #tpu.memory_space<vmem>>, vector<128x128xbf16>
    %cst_33 = arith.constant dense<0.000000e+00> : vector<8x128xf32>
    %81 = tpu.matmul %79, %80, %cst_33 {dimension_numbers = #tpu.dot_dimension_numbers<[1], [0], [0], [1], [0, 0, 1, 1], [], []>} : vector<8x128xbf16>, vector<128x128xbf16>, vector<8x128xf32> -> vector<8x128xf32>
    %c0_34 = arith.constant 0 : index
    %c0_35 = arith.constant 0 : index
    %82 = vector.load %arg11[%c0_34, %c0_35] : memref<1x128xf32, #tpu.memory_space<vmem>>, vector<1x128xf32>
    %83 = vector.broadcast %82 : vector<1x128xf32> to vector<8x128xf32>
    %84 = arith.addf %81, %83 : vector<8x128xf32>
    %c0_36 = arith.constant 0 : index
    %c0_37 = arith.constant 0 : index
    %85 = vector.load %arg12[%c0_36, %c0_37] : memref<8x128xf32, #tpu.memory_space<vmem>>, vector<8x128xf32>
    tpu.vector_store %arg12[%c0_36, %c0_37], %84 {strides = array<i32>} : memref<8x128xf32, #tpu.memory_space<vmem>>, vector<8x128xf32>,
    return
  }
  func.func @transform_0(%arg0: i32) -> (i32, i32) {
    %c0_i32 = arith.constant 0 : i32
    %c0_i32_0 = arith.constant 0 : i32
    return %arg0, %c0_i32 : i32, i32
  }
  func.func @transform_1(%arg0: i32) -> (i32, i32) {
    %c0_i32 = arith.constant 0 : i32
    %c0_i32_0 = arith.constant 0 : i32
    return %arg0, %c0_i32 : i32, i32
  }
  func.func @transform_2(%arg0: i32) -> (i32, i32, i32) {
    %c0_i32 = arith.constant 0 : i32
    %c0_i32_0 = arith.constant 0 : i32
    %c0_i32_1 = arith.constant 0 : i32
    return %c0_i32, %arg0, %c0_i32_0 : i32, i32, i32
  }
  func.func @transform_3(%arg0: i32) -> (i32, i32) {
    %c0_i32 = arith.constant 0 : i32
    %c0_i32_0 = arith.constant 0 : i32
    %c0_i32_1 = arith.constant 0 : i32
    return %c0_i32, %c0_i32_0 : i32, i32
  }
  func.func @transform_4(%arg0: i32) -> (i32, i32) {
    %c0_i32 = arith.constant 0 : i32
    %c0_i32_0 = arith.constant 0 : i32
    %c0_i32_1 = arith.constant 0 : i32
    return %c0_i32, %c0_i32_0 : i32, i32
  }
  func.func @transform_5(%arg0: i32) -> (i32, i32) {
    %c0_i32 = arith.constant 0 : i32
    %c0_i32_0 = arith.constant 0 : i32
    %c0_i32_1 = arith.constant 0 : i32
    return %c0_i32, %c0_i32_0 : i32, i32
  }
  func.func @transform_6(%arg0: i32) -> (i32, i32) {
    %c0_i32 = arith.constant 0 : i32
    %c0_i32_0 = arith.constant 0 : i32
    %c0_i32_1 = arith.constant 0 : i32
    return %c0_i32, %c0_i32_0 : i32, i32
  }
  func.func @transform_7(%arg0: i32) -> (i32, i32) {
    %c0_i32 = arith.constant 0 : i32
    %c0_i32_0 = arith.constant 0 : i32
    %c0_i32_1 = arith.constant 0 : i32
    return %c0_i32, %c0_i32_0 : i32, i32
  }
  func.func @transform_8(%arg0: i32) -> (i32, i32) {
    %c0_i32 = arith.constant 0 : i32
    %c0_i32_0 = arith.constant 0 : i32
    %c0_i32_1 = arith.constant 0 : i32
    return %c0_i32, %c0_i32_0 : i32, i32
  }
  func.func @transform_9(%arg0: i32) -> (i32, i32) {
    %c0_i32 = arith.constant 0 : i32
    %c0_i32_0 = arith.constant 0 : i32
    %c0_i32_1 = arith.constant 0 : i32
    return %c0_i32, %c0_i32_0 : i32, i32
  }
  func.func @transform_10(%arg0: i32) -> (i32, i32) {
    %c0_i32 = arith.constant 0 : i32
    %c0_i32_0 = arith.constant 0 : i32
    %c0_i32_1 = arith.constant 0 : i32
    return %c0_i32, %c0_i32_0 : i32, i32
  }
  func.func @transform_11(%arg0: i32) -> (i32, i32) {
    %c0_i32 = arith.constant 0 : i32
    %c0_i32_0 = arith.constant 0 : i32
    return %arg0, %c0_i32 : i32, i32
  }
  func.func @transform_12(%arg0: i32) -> (i32, i32, i32) {
    %c0_i32 = arith.constant 0 : i32
    %c0_i32_0 = arith.constant 0 : i32
    %c0_i32_1 = arith.constant 0 : i32
    return %c0_i32, %arg0, %c0_i32_0 : i32, i32, i32
  }
}

</mosaic_0001>

<llo_original>
// kernel: tpu_custom_call.1
$region0: #{tpu_custom_call.1}
  #allocation0 [shape = 'u32[]', space=smem, size = 0x4, offset = 0x4, fixed_abs, tag = 'smem constant byte address 0x4 - core index']
  #allocation1 [shape = 'u32[144,128]{1,0:T(1,128)}', space=vmem, size = 0x12000, scoped, tag = 'internal scratch']
  %s0 = inlined_call_operand.vmem [shape: f32[8,128], index: 0, kind: input, shape index: {}]
  %s1 = inlined_call_operand.vmem [shape: f32[8,1], index: 1, kind: input, shape index: {}]
  %s2 = inlined_call_operand.hbm [shape: f32[2,8,256], index: 2, kind: input, shape index: {}, may-alias: {2,12}]
  %s3 = inlined_call_operand.hbm [shape: bf16[256,512], index: 3, kind: input, shape index: {}]
  %s4 = inlined_call_operand.vmem [shape: f32[1,512], index: 4, kind: input, shape index: {}]
  %s5 = inlined_call_operand.hbm [shape: bf16[256,512], index: 5, kind: input, shape index: {}]
  %s6 = inlined_call_operand.vmem [shape: f32[1,512], index: 6, kind: input, shape index: {}]
  %s7 = inlined_call_operand.vmem [shape: bf16[128,128], index: 7, kind: input, shape index: {}]
  %s8 = inlined_call_operand.vmem [shape: f32[1,128], index: 8, kind: input, shape index: {}]
  %s9 = inlined_call_operand.hbm [shape: bf16[128,128], index: 9, kind: input, shape index: {}]
  %s10 = inlined_call_operand.vmem [shape: f32[1,128], index: 10, kind: input, shape index: {}]
  %s11 = inlined_call_operand.hbm [shape: f32[8,128], index: 11, kind: output, shape index: {0}]
  %s12 = inlined_call_operand.hbm [shape: f32[2,8,256], index: 12, kind: output, shape index: {1}, may-alias: {2,12}]
  %13 = xla_tuple %s11, %s12
  %s14 = sld [smem:[#allocation0]]
  $region78: #{tpu_custom_call.1} parent=0
    _
  %s16 = ssub.s32 1, %s14
  %s17 = scalar_select 0, %s16, %s14
  $region1: #{tpu_custom_call.1} parent=0
    #allocation2 [shape = 'u8[16384]{0}', space=vmem, size = 0x4000, scoped, tag = 'input window, operand 2, single buffered']
    #allocation3 [shape = 's32[1]{0}', space=sflag, size = 0x4, scoped, tag = 'scoped memory for tpu_custom_call.1']
    #allocation4 [shape = 's32[1]{0}', space=sflag, size = 0x4, scoped, tag = 'scoped memory for tpu_custom_call.1']
    #allocation5 [shape = 'u8[262144]{0}', space=vmem, size = 0x40000, scoped, tag = 'input window, operand 3, single buffered']
    #allocation6 [shape = 's32[1]{0}', space=sflag, size = 0x4, scoped, tag = 'scoped memory for tpu_custom_call.1']
    #allocation7 [shape = 'u8[262144]{0}', space=vmem, size = 0x40000, scoped, tag = 'input window, operand 5, single buffered']
    #allocation8 [shape = 'u8[32768]{0}', space=vmem, size = 0x8000, scoped, tag = 'input window, operand 9, single buffered']
    #allocation9 [shape = 's32[1]{0}', space=sflag, size = 0x4, scoped, tag = 'scoped memory for tpu_custom_call.1']
    #allocation10 [shape = 'u8[4096]{0}', space=vmem, size = 0x1000, scoped, tag = 'output window, operand 0, single buffered']
    #allocation11 [shape = 'u8[16384]{0}', space=vmem, size = 0x4000, scoped, tag = 'output window, operand 1, single buffered']
    #allocation12 [shape = 's32[1]{0}', space=sflag, size = 0x4, scoped, tag = 'scoped memory for tpu_custom_call.1']
    %18 = vsyncpa [#allocation3], 0
    %19 = vsyncpa [#allocation6], 0
    %20 = vsyncpa [#allocation9], 0
    %21 = vsyncpa [#allocation4], 0
    %22 = vsyncpa [#allocation12], 0
    // Predicated region
    $region2: #{tpu_custom_call.1} parent=1 // pred_check
      _
    $region3: #{tpu_custom_call.1} parent=1 // pred_check_branch
      %24 = sbr.rel (0) target = $region5
    $region4: #{tpu_custom_call.1} parent=1 // pred_region
      _
    $region5: #{tpu_custom_call.1} parent=1 // pred_fallthru
      _
    // Predicated region
    $region6: #{tpu_custom_call.1} parent=1 // pred_check
      _
    $region7: #{tpu_custom_call.1} parent=1 // pred_check_branch
      %26 = sbr.rel (0) target = $region9
    $region8: #{tpu_custom_call.1} parent=1 // pred_region
      _
    $region9: #{tpu_custom_call.1} parent=1 // pred_fallthru
      _
    // Predicated region
    $region10: #{tpu_custom_call.1} parent=1 // pred_check
      _
    $region11: #{tpu_custom_call.1} parent=1 // pred_check_branch
      %28 = sbr.rel (0) target = $region13
    $region12: #{tpu_custom_call.1} parent=1 // pred_region
      %s30 = ssub.s32 512, 512
      %31 = vsyncadd [#allocation3], %s30
      %s32 = sshll.u32 [#allocation2], 4
      %s33 = int_to_ptr.vmem [resolvable:$true] %s32
      %38 = dma.hbm_to_vmem [thread:$0]  %s2, 512, %s33, [#allocation3], 256, 256, 16
    $region13: #{tpu_custom_call.1} parent=1 // pred_fallthru
      _
    // Predicated region
    $region14: #{tpu_custom_call.1} parent=1 // pred_check
      _
    $region15: #{tpu_custom_call.1} parent=1 // pred_check_branch
      %40 = sbr.rel (0) target = $region17
    $region16: #{tpu_custom_call.1} parent=1 // pred_region
      %s42 = ssub.s32 8192, 8192
      %43 = vsyncadd [#allocation6], %s42
      %s44 = sshll.u32 [#allocation5], 4
      %s45 = int_to_ptr.vmem [resolvable:$true] %s44
      %50 = dma.hbm_to_vmem [thread:$0]  %s3, 8192, %s45, [#allocation6], 256, 256, 16
    $region17: #{tpu_custom_call.1} parent=1 // pred_fallthru
      _
    // Predicated region
    $region18: #{tpu_custom_call.1} parent=1 // pred_check
      _
    $region19: #{tpu_custom_call.1} parent=1 // pred_check_branch
      %52 = sbr.rel (0) target = $region21
    $region20: #{tpu_custom_call.1} parent=1 // pred_region
      _
    $region21: #{tpu_custom_call.1} parent=1 // pred_fallthru
      _
    // Predicated region
    $region22: #{tpu_custom_call.1} parent=1 // pred_check
      _
    $region23: #{tpu_custom_call.1} parent=1 // pred_check_branch
      %54 = sbr.rel (0) target = $region25
    $region24: #{tpu_custom_call.1} parent=1 // pred_region
      %s56 = ssub.s32 8192, 8192
      %57 = vsyncadd [#allocation6], %s56
      %s58 = sshll.u32 [#allocation7], 4
      %s59 = int_to_ptr.vmem [resolvable:$true] %s58
      %64 = dma.hbm_to_vmem [thread:$0]  %s5, 8192, %s59, [#allocation6], 256, 256, 16
    $region25: #{tpu_custom_call.1} parent=1 // pred_fallthru
      _
    // Predicated region
    $region26: #{tpu_custom_call.1} parent=1 // pred_check
      _
    $region27: #{tpu_custom_call.1} parent=1 // pred_check_branch
      %66 = sbr.rel (0) target = $region29
    $region28: #{tpu_custom_call.1} parent=1 // pred_region
      _
    $region29: #{tpu_custom_call.1} parent=1 // pred_fallthru
      _
    // Predicated region
    $region30: #{tpu_custom_call.1} parent=1 // pred_check
      _
    $region31: #{tpu_custom_call.1} parent=1 // pred_check_branch
      %68 = sbr.rel (0) target = $region33
    $region32: #{tpu_custom_call.1} parent=1 // pred_region
      _
    $region33: #{tpu_custom_call.1} parent=1 // pred_fallthru
      _
    // Predicated region
    $region34: #{tpu_custom_call.1} parent=1 // pred_check
      _
    $region35: #{tpu_custom_call.1} parent=1 // pred_check_branch
      %70 = sbr.rel (0) target = $region37
    $region36: #{tpu_custom_call.1} parent=1 // pred_region
      _
    $region37: #{tpu_custom_call.1} parent=1 // pred_fallthru
      _
    // Predicated region
    $region38: #{tpu_custom_call.1} parent=1 // pred_check
      _
    $region39: #{tpu_custom_call.1} parent=1 // pred_check_branch
      %72 = sbr.rel (0) target = $region41
    $region40: #{tpu_custom_call.1} parent=1 // pred_region
      %s74 = ssub.s32 1024, 1024
      %75 = vsyncadd [#allocation9], %s74
      %s76 = sshll.u32 [#allocation8], 4
      %s77 = int_to_ptr.vmem [resolvable:$true] %s76
      %82 = dma.hbm_to_vmem [thread:$0]  %s9, 1024, %s77, [#allocation9], 64, 64, 4
    $region41: #{tpu_custom_call.1} parent=1 // pred_fallthru
      _
    // Predicated region
    $region42: #{tpu_custom_call.1} parent=1 // pred_check
      _
    $region43: #{tpu_custom_call.1} parent=1 // pred_check_branch
      %84 = sbr.rel (0) target = $region45
    $region44: #{tpu_custom_call.1} parent=1 // pred_region
      _
    $region45: #{tpu_custom_call.1} parent=1 // pred_fallthru
      _
    // Predicated region
    $region46: #{tpu_custom_call.1} parent=1 // pred_check
      _
    $region47: #{tpu_custom_call.1} parent=1 // pred_check_branch
      %86 = sbr.rel (0) target = $region49
    $region48: #{tpu_custom_call.1} parent=1 // pred_region
      %87 = dma.done [#allocation3], 512
    $region49: #{tpu_custom_call.1} parent=1 // pred_fallthru
      _
    // Predicated region
    $region50: #{tpu_custom_call.1} parent=1 // pred_check
      _
    $region51: #{tpu_custom_call.1} parent=1 // pred_check_branch
      %89 = sbr.rel (0) target = $region53
    $region52: #{tpu_custom_call.1} parent=1 // pred_region
      %90 = dma.done [#allocation6], 8192
    $region53: #{tpu_custom_call.1} parent=1 // pred_fallthru
      _
    // Predicated region
    $region54: #{tpu_custom_call.1} parent=1 // pred_check
      _
    $region55: #{tpu_custom_call.1} parent=1 // pred_check_branch
      %92 = sbr.rel (0) target = $region57
    $region56: #{tpu_custom_call.1} parent=1 // pred_region
      %93 = dma.done [#allocation6], 8192
    $region57: #{tpu_custom_call.1} parent=1 // pred_fallthru
      _
    // Predicated region
    $region58: #{tpu_custom_call.1} parent=1 // pred_check
      _
    $region59: #{tpu_custom_call.1} parent=1 // pred_check_branch
      %95 = sbr.rel (0) target = $region61
    $region60: #{tpu_custom_call.1} parent=1 // pred_region
      %96 = dma.done [#allocation9], 1024
    $region61: #{tpu_custom_call.1} parent=1 // pred_fallthru
      _
    %v98 = vld [vmem:[%s1] sm:$0xff]
    %v99 = vsub.f32 1.0, %v98
    %v100 = vld [vmem:[%s0] sm:$0xff]
    %v101 = vld [vmem:[#allocation2] sm:$0xff]
    %v102 = vld [vmem:[#allocation2 + $0x8] sm:$0xff]
    %104 = vset.pattern.permute.xlu0 0
    %105 = vperm.xlu0 %104, %v99
    %v106 = vpop.permute.xlu0 %105
    %v108 = vmul.f32 %v101, %v106
    %v109 = vmul.f32 %v102, %v106
    %v110 = vpack.c.bf16 %v100, %v100
    %v111 = vpack.c.bf16 %v108, %v108
    %v112 = vld [vmem:[#allocation5] sm:$0xff]
    %v113 = vld [vmem:[#allocation5 + $0x8] sm:$0xff]
    %v114 = vld [vmem:[#allocation5 + $0x10] sm:$0xff]
    %v115 = vld [vmem:[#allocation5 + $0x18] sm:$0xff]
    %v116 = vld [vmem:[#allocation5 + $0x20] sm:$0xff]
    %v117 = vld [vmem:[#allocation5 + $0x28] sm:$0xff]
    %v118 = vld [vmem:[#allocation5 + $0x30] sm:$0xff]
    %v119 = vld [vmem:[#allocation5 + $0x38] sm:$0xff]
    %v120 = vld [vmem:[#allocation5 + $0x40] sm:$0xff]
    %v121 = vld [vmem:[#allocation5 + $0x48] sm:$0xff]
    %v122 = vld [vmem:[#allocation5 + $0x50] sm:$0xff]
    %v123 = vld [vmem:[#allocation5 + $0x58] sm:$0xff]
    %v124 = vld [vmem:[#allocation5 + $0x60] sm:$0xff]
    %v125 = vld [vmem:[#allocation5 + $0x68] sm:$0xff]
    %v126 = vld [vmem:[#allocation5 + $0x70] sm:$0xff]
    %v127 = vld [vmem:[#allocation5 + $0x78] sm:$0xff]
    %v128 = vld [vmem:[#allocation5 + $0x80] sm:$0xff]
    %v129 = vld [vmem:[#allocation5 + $0x88] sm:$0xff]
    %v130 = vld [vmem:[#allocation5 + $0x90] sm:$0xff]
    %v131 = vld [vmem:[#allocation5 + $0x98] sm:$0xff]
    %v132 = vld [vmem:[#allocation5 + $0xa0] sm:$0xff]
    %v133 = vld [vmem:[#allocation5 + $0xa8] sm:$0xff]
    %v134 = vld [vmem:[#allocation5 + $0xb0] sm:$0xff]
    %v135 = vld [vmem:[#allocation5 + $0xb8] sm:$0xff]
    %v136 = vld [vmem:[#allocation5 + $0xc0] sm:$0xff]
    %v137 = vld [vmem:[#allocation5 + $0xc8] sm:$0xff]
    %v138 = vld [vmem:[#allocation5 + $0xd0] sm:$0xff]
    %v139 = vld [vmem:[#allocation5 + $0xd8] sm:$0xff]
    %v140 = vld [vmem:[#allocation5 + $0xe0] sm:$0xff]
    %v141 = vld [vmem:[#allocation5 + $0xe8] sm:$0xff]
    %v142 = vld [vmem:[#allocation5 + $0xf0] sm:$0xff]
    %v143 = vld [vmem:[#allocation5 + $0xf8] sm:$0xff]
    %v144 = vld [vmem:[#allocation5 + $0x100] sm:$0xff]
    %v145 = vld [vmem:[#allocation5 + $0x108] sm:$0xff]
    %v146 = vld [vmem:[#allocation5 + $0x110] sm:$0xff]
    %v147 = vld [vmem:[#allocation5 + $0x118] sm:$0xff]
    %v148 = vld [vmem:[#allocation5 + $0x120] sm:$0xff]
    %v149 = vld [vmem:[#allocation5 + $0x128] sm:$0xff]
    %v150 = vld [vmem:[#allocation5 + $0x130] sm:$0xff]
    %v151 = vld [vmem:[#allocation5 + $0x138] sm:$0xff]
    %v152 = vld [vmem:[#allocation5 + $0x140] sm:$0xff]
    %v153 = vld [vmem:[#allocation5 + $0x148] sm:$0xff]
    %v154 = vld [vmem:[#allocation5 + $0x150] sm:$0xff]
    %v155 = vld [vmem:[#allocation5 + $0x158] sm:$0xff]
    %v156 = vld [vmem:[#allocation5 + $0x160] sm:$0xff]
    %v157 = vld [vmem:[#allocation5 + $0x168] sm:$0xff]
    %v158 = vld [vmem:[#allocation5 + $0x170] sm:$0xff]
    %v159 = vld [vmem:[#allocation5 + $0x178] sm:$0xff]
    %v160 = vld [vmem:[#allocation5 + $0x180] sm:$0xff]
    %v161 = vld [vmem:[#allocation5 + $0x188] sm:$0xff]
    %v162 = vld [vmem:[#allocation5 + $0x190] sm:$0xff]
    %v163 = vld [vmem:[#allocation5 + $0x198] sm:$0xff]
    %v164 = vld [vmem:[#allocation5 + $0x1a0] sm:$0xff]
    %v165 = vld [vmem:[#allocation5 + $0x1a8] sm:$0xff]
    %v166 = vld [vmem:[#allocation5 + $0x1b0] sm:$0xff]
    %v167 = vld [vmem:[#allocation5 + $0x1b8] sm:$0xff]
    %v168 = vld [vmem:[#allocation5 + $0x1c0] sm:$0xff]
    %v169 = vld [vmem:[#allocation5 + $0x1c8] sm:$0xff]
    %v170 = vld [vmem:[#allocation5 + $0x1d0] sm:$0xff]
    %v171 = vld [vmem:[#allocation5 + $0x1d8] sm:$0xff]
    %v172 = vld [vmem:[#allocation5 + $0x1e0] sm:$0xff]
    %v173 = vld [vmem:[#allocation5 + $0x1e8] sm:$0xff]
    %v174 = vld [vmem:[#allocation5 + $0x1f0] sm:$0xff]
    %v175 = vld [vmem:[#allocation5 + $0x1f8] sm:$0xff]
    %v176 = vld [vmem:[%s4] sm:$0xf]
    %v178 = vlaneseq
    %v179 = vshrl.u32 %v178, 7
    %v180 = vsub.s32 0, %v179
    %v181 = vrot.slane %v176, %v180
    %v182 = vlaneseq
    %v183 = vshrl.u32 %v182, 7
    %v184 = vsub.s32 1, %v183
    %v185 = vrot.slane %v176, %v184
    %v186 = vlaneseq
    %v187 = vshrl.u32 %v186, 7
    %v188 = vsub.s32 2, %v187
    %v189 = vrot.slane %v176, %v188
    %v190 = vlaneseq
    %v191 = vshrl.u32 %v190, 7
    %v192 = vsub.s32 3, %v191
    %v193 = vrot.slane %v176, %v192
    %v262 = vunpack.c.l.b16 %v112
    %v263 = vunpack.c.h.b16 %v112
    %v264 = vunpack.c.l.b16 %v113
    %v265 = vunpack.c.h.b16 %v113
    %v266 = vunpack.c.l.b16 %v114
    %v267 = vunpack.c.h.b16 %v114
    %v268 = vunpack.c.l.b16 %v115
    %v269 = vunpack.c.h.b16 %v115
    %v270 = vunpack.c.l.b16 %v116
    %v271 = vunpack.c.h.b16 %v116
    %v272 = vunpack.c.l.b16 %v117
    %v273 = vunpack.c.h.b16 %v117
    %v274 = vunpack.c.l.b16 %v118
    %v275 = vunpack.c.h.b16 %v118
    %v276 = vunpack.c.l.b16 %v119
    %v277 = vunpack.c.h.b16 %v119
    %v278 = vunpack.c.l.b16 %v120
    %v279 = vunpack.c.h.b16 %v120
    %v280 = vunpack.c.l.b16 %v121
    %v281 = vunpack.c.h.b16 %v121
    %v282 = vunpack.c.l.b16 %v122
    %v283 = vunpack.c.h.b16 %v122
    %v284 = vunpack.c.l.b16 %v123
    %v285 = vunpack.c.h.b16 %v123
    %v286 = vunpack.c.l.b16 %v124
    %v287 = vunpack.c.h.b16 %v124
    %v288 = vunpack.c.l.b16 %v125
    %v289 = vunpack.c.h.b16 %v125
    %v290 = vunpack.c.l.b16 %v126
    %v291 = vunpack.c.h.b16 %v126
    %v292 = vunpack.c.l.b16 %v127
    %v293 = vunpack.c.h.b16 %v127
    %v294 = vunpack.c.l.b16 %v128
    %v295 = vunpack.c.h.b16 %v128
    %v296 = vunpack.c.l.b16 %v129
    %v297 = vunpack.c.h.b16 %v129
    %v298 = vunpack.c.l.b16 %v130
    %v299 = vunpack.c.h.b16 %v130
    %v300 = vunpack.c.l.b16 %v131
    %v301 = vunpack.c.h.b16 %v131
    %v302 = vunpack.c.l.b16 %v132
    %v303 = vunpack.c.h.b16 %v132
    %v304 = vunpack.c.l.b16 %v133
    %v305 = vunpack.c.h.b16 %v133
    %v306 = vunpack.c.l.b16 %v134
    %v307 = vunpack.c.h.b16 %v134
    %v308 = vunpack.c.l.b16 %v135
    %v309 = vunpack.c.h.b16 %v135
    %v310 = vunpack.c.l.b16 %v136
    %v311 = vunpack.c.h.b16 %v136
    %v312 = vunpack.c.l.b16 %v137
    %v313 = vunpack.c.h.b16 %v137
    %v314 = vunpack.c.l.b16 %v138
    %v315 = vunpack.c.h.b16 %v138
    %v316 = vunpack.c.l.b16 %v139
    %v317 = vunpack.c.h.b16 %v139
    %v318 = vunpack.c.l.b16 %v140
    %v319 = vunpack.c.h.b16 %v140
    %v320 = vunpack.c.l.b16 %v141
    %v321 = vunpack.c.h.b16 %v141
    %v322 = vunpack.c.l.b16 %v142
    %v323 = vunpack.c.h.b16 %v142
    %v324 = vunpack.c.l.b16 %v143
    %v325 = vunpack.c.h.b16 %v143
    %v326 = vunpack.c.l.b16 %v144
    %v327 = vunpack.c.h.b16 %v144
    %v328 = vunpack.c.l.b16 %v145
    %v329 = vunpack.c.h.b16 %v145
    %v330 = vunpack.c.l.b16 %v146
    %v331 = vunpack.c.h.b16 %v146
    %v332 = vunpack.c.l.b16 %v147
    %v333 = vunpack.c.h.b16 %v147
    %v334 = vunpack.c.l.b16 %v148
    %v335 = vunpack.c.h.b16 %v148
    %v336 = vunpack.c.l.b16 %v149
    %v337 = vunpack.c.h.b16 %v149
    %v338 = vunpack.c.l.b16 %v150
    %v339 = vunpack.c.h.b16 %v150
    %v340 = vunpack.c.l.b16 %v151
    %v341 = vunpack.c.h.b16 %v151
    %v342 = vunpack.c.l.b16 %v152
    %v343 = vunpack.c.h.b16 %v152
    %v344 = vunpack.c.l.b16 %v153
    %v345 = vunpack.c.h.b16 %v153
    %v346 = vunpack.c.l.b16 %v154
    %v347 = vunpack.c.h.b16 %v154
    %v348 = vunpack.c.l.b16 %v155
    %v349 = vunpack.c.h.b16 %v155
    %v350 = vunpack.c.l.b16 %v156
    %v351 = vunpack.c.h.b16 %v156
    %v352 = vunpack.c.l.b16 %v157
    %v353 = vunpack.c.h.b16 %v157
    %v354 = vunpack.c.l.b16 %v158
    %v355 = vunpack.c.h.b16 %v158
    %v356 = vunpack.c.l.b16 %v159
    %v357 = vunpack.c.h.b16 %v159
    %v358 = vunpack.c.l.b16 %v160
    %v359 = vunpack.c.h.b16 %v160
    %v360 = vunpack.c.l.b16 %v161
    %v361 = vunpack.c.h.b16 %v161
    %v362 = vunpack.c.l.b16 %v162
    %v363 = vunpack.c.h.b16 %v162
    %v364 = vunpack.c.l.b16 %v163
    %v365 = vunpack.c.h.b16 %v163
    %v366 = vunpack.c.l.b16 %v164
    %v367 = vunpack.c.h.b16 %v164
    %v368 = vunpack.c.l.b16 %v165
    %v369 = vunpack.c.h.b16 %v165
    %v370 = vunpack.c.l.b16 %v166
    %v371 = vunpack.c.h.b16 %v166
    %v372 = vunpack.c.l.b16 %v167
    %v373 = vunpack.c.h.b16 %v167
    %v374 = vunpack.c.l.b16 %v168
    %v375 = vunpack.c.h.b16 %v168
    %v376 = vunpack.c.l.b16 %v169
    %v377 = vunpack.c.h.b16 %v169
    %v378 = vunpack.c.l.b16 %v170
    %v379 = vunpack.c.h.b16 %v170
    %v380 = vunpack.c.l.b16 %v171
    %v381 = vunpack.c.h.b16 %v171
    %v382 = vunpack.c.l.b16 %v172
    %v383 = vunpack.c.h.b16 %v172
    %v384 = vunpack.c.l.b16 %v173
    %v385 = vunpack.c.h.b16 %v173
    %v386 = vunpack.c.l.b16 %v174
    %v387 = vunpack.c.h.b16 %v174
    %v388 = vunpack.c.l.b16 %v175
    %v389 = vunpack.c.h.b16 %v175
    %v390 = vpack.c.b16 %v266, %v262
    %v391 = vpack.c.b16 %v267, %v263
    %v392 = vpack.c.b16 %v268, %v264
    %v393 = vpack.c.b16 %v269, %v265
    %v394 = vpack.c.b16 %v274, %v270
    %v395 = vpack.c.b16 %v275, %v271
    %v396 = vpack.c.b16 %v276, %v272
    %v397 = vpack.c.b16 %v277, %v273
    %v398 = vpack.c.b16 %v282, %v278
    %v399 = vpack.c.b16 %v283, %v279
    %v400 = vpack.c.b16 %v284, %v280
    %v401 = vpack.c.b16 %v285, %v281
    %v402 = vpack.c.b16 %v290, %v286
    %v403 = vpack.c.b16 %v291, %v287
    %v404 = vpack.c.b16 %v292, %v288
    %v405 = vpack.c.b16 %v293, %v289
    %v406 = vpack.c.b16 %v298, %v294
    %v407 = vpack.c.b16 %v299, %v295
    %v408 = vpack.c.b16 %v300, %v296
    %v409 = vpack.c.b16 %v301, %v297
    %v410 = vpack.c.b16 %v306, %v302
    %v411 = vpack.c.b16 %v307, %v303
    %v412 = vpack.c.b16 %v308, %v304
    %v413 = vpack.c.b16 %v309, %v305
    %v414 = vpack.c.b16 %v314, %v310
    %v415 = vpack.c.b16 %v315, %v311
    %v416 = vpack.c.b16 %v316, %v312
    %v417 = vpack.c.b16 %v317, %v313
    %v418 = vpack.c.b16 %v322, %v318
    %v419 = vpack.c.b16 %v323, %v319
    %v420 = vpack.c.b16 %v324, %v320
    %v421 = vpack.c.b16 %v325, %v321
    %v422 = vpack.c.b16 %v330, %v326
    %v423 = vpack.c.b16 %v331, %v327
    %v424 = vpack.c.b16 %v332, %v328
    %v425 = vpack.c.b16 %v333, %v329
    %v426 = vpack.c.b16 %v338, %v334
    %v427 = vpack.c.b16 %v339, %v335
    %v428 = vpack.c.b16 %v340, %v336
    %v429 = vpack.c.b16 %v341, %v337
    %v430 = vpack.c.b16 %v346, %v342
    %v431 = vpack.c.b16 %v347, %v343
    %v432 = vpack.c.b16 %v348, %v344
    %v433 = vpack.c.b16 %v349, %v345
    %v434 = vpack.c.b16 %v354, %v350
    %v435 = vpack.c.b16 %v355, %v351
    %v436 = vpack.c.b16 %v356, %v352
    %v437 = vpack.c.b16 %v357, %v353
    %v438 = vpack.c.b16 %v362, %v358
    %v439 = vpack.c.b16 %v363, %v359
    %v440 = vpack.c.b16 %v364, %v360
    %v441 = vpack.c.b16 %v365, %v361
    %v442 = vpack.c.b16 %v370, %v366
    %v443 = vpack.c.b16 %v371, %v367
    %v444 = vpack.c.b16 %v372, %v368
    %v445 = vpack.c.b16 %v373, %v369
    %v446 = vpack.c.b16 %v378, %v374
    %v447 = vpack.c.b16 %v379, %v375
    %v448 = vpack.c.b16 %v380, %v376
    %v449 = vpack.c.b16 %v381, %v377
    %v450 = vpack.c.b16 %v386, %v382
    %v451 = vpack.c.b16 %v387, %v383
    %v452 = vpack.c.b16 %v388, %v384
    %v453 = vpack.c.b16 %v389, %v385
    %518 = vmatprep.subr.bf16.mxu0 %v391
    %519 = vmatpush1.bf16.msra.mxu0 %v390
    %520 = vmatprep.subr.bf16.mxu0 %v395
    %521 = vmatpush1.bf16.msra.mxu0 %v394
    %522 = vmatprep.subr.bf16.mxu0 %v399
    %523 = vmatpush1.bf16.msra.mxu0 %v398
    %524 = vmatprep.subr.bf16.mxu0 %v403
    %525 = vmatpush1.bf16.msra.mxu0 %v402
    %526 = vmatprep.subr.bf16.mxu0 %v407
    %527 = vmatpush1.bf16.msra.mxu0 %v406
    %528 = vmatprep.subr.bf16.mxu0 %v411
    %529 = vmatpush1.bf16.msra.mxu0 %v410
    %530 = vmatprep.subr.bf16.mxu0 %v415
    %531 = vmatpush1.bf16.msra.mxu0 %v414
    %532 = vmatprep.subr.bf16.mxu0 %v419
    %533 = vmatpush1.bf16.msra.mxu0 %v418
    %534 = vmatprep.subr.bf16.mxu0 %v423
    %535 = vmatpush1.bf16.msra.mxu0 %v422
    %536 = vmatprep.subr.bf16.mxu0 %v427
    %537 = vmatpush1.bf16.msra.mxu0 %v426
    %538 = vmatprep.subr.bf16.mxu0 %v431
    %539 = vmatpush1.bf16.msra.mxu0 %v430
    %540 = vmatprep.subr.bf16.mxu0 %v435
    %541 = vmatpush1.bf16.msra.mxu0 %v434
    %542 = vmatprep.subr.bf16.mxu0 %v439
    %543 = vmatpush1.bf16.msra.mxu0 %v438
    %544 = vmatprep.subr.bf16.mxu0 %v443
    %545 = vmatpush1.bf16.msra.mxu0 %v442
    %546 = vmatprep.subr.bf16.mxu0 %v447
    %547 = vmatpush1.bf16.msra.mxu0 %v446
    %548 = vmatprep.subr.bf16.mxu0 %v451
    %549 = vmatpush1.bf16.msra.mxu0 %v450
    %550 = vmatprep.mubr.bf16.mxu0 %v111
    %551 = vmatmul.mubr.bf16.gmra.mrb[0].mxu0 %v110
    %v552 = vpop.f32.mrb[0].mxu0
    %v553 = vadd.f32 %v181, %v552
    %v554 = vpop.f32.mrb[0].mxu0
    %v555 = vadd.f32 %v185, %v554
    %v556 = vpop.f32.mrb[0].mxu0
    %v557 = vpop.f32.mrb[0].mxu0
    %558 = vdwg.mxu0
    %559 = vmatprep.subr.bf16.mxu0 %v393
    %560 = vmatpush1.bf16.msra.mxu0 %v392
    %561 = vmatprep.subr.bf16.mxu0 %v397
    %562 = vmatpush1.bf16.msra.mxu0 %v396
    %563 = vmatprep.subr.bf16.mxu0 %v401
    %564 = vmatpush1.bf16.msra.mxu0 %v400
    %565 = vmatprep.subr.bf16.mxu0 %v405
    %566 = vmatpush1.bf16.msra.mxu0 %v404
    %567 = vmatprep.subr.bf16.mxu0 %v409
    %568 = vmatpush1.bf16.msra.mxu0 %v408
    %569 = vmatprep.subr.bf16.mxu0 %v413
    %570 = vmatpush1.bf16.msra.mxu0 %v412
    %571 = vmatprep.subr.bf16.mxu0 %v417
    %572 = vmatpush1.bf16.msra.mxu0 %v416
    %573 = vmatprep.subr.bf16.mxu0 %v421
    %574 = vmatpush1.bf16.msra.mxu0 %v420
    %575 = vmatprep.subr.bf16.mxu0 %v425
    %576 = vmatpush1.bf16.msra.mxu0 %v424
    %577 = vmatprep.subr.bf16.mxu0 %v429
    %578 = vmatpush1.bf16.msra.mxu0 %v428
    %579 = vmatprep.subr.bf16.mxu0 %v433
    %580 = vmatpush1.bf16.msra.mxu0 %v432
    %581 = vmatprep.subr.bf16.mxu0 %v437
    %582 = vmatpush1.bf16.msra.mxu0 %v436
    %583 = vmatprep.subr.bf16.mxu0 %v441
    %584 = vmatpush1.bf16.msra.mxu0 %v440
    %585 = vmatprep.subr.bf16.mxu0 %v445
    %586 = vmatpush1.bf16.msra.mxu0 %v444
    %587 = vmatprep.subr.bf16.mxu0 %v449
    %588 = vmatpush1.bf16.msra.mxu0 %v448
    %589 = vmatprep.subr.bf16.mxu0 %v453
    %590 = vmatpush1.bf16.msra.mxu0 %v452
    %591 = vmatprep.mubr.bf16.mxu0 %v111
    %592 = vmatmul.mubr.bf16.gmra.mrb[0].mxu0 %v110
    %v593 = vpop.f32.mrb[0].mxu0
    %v594 = vadd.f32 %v189, %v593
    %v595 = vpop.f32.mrb[0].mxu0
    %v596 = vadd.f32 %v193, %v595
    %v597 = vpop.f32.mrb[0].mxu0
    %v598 = vpop.f32.mrb[0].mxu0
    %599 = vdwg.mxu0
    %v600 = vxor.u32 %v553, 2147483648
    %v601 = vxor.u32 %v555, 2147483648
    %v602 = vxor.u32 %v596, 2147483648
    %v603 = vmul.f32 %v600, 1.442695
    %v604 = vpow.pop %v603
    %v605 = vmul.f32 %v601, 1.442695
    %v606 = vpow.pop %v605
    %v607 = vmul.f32 %v602, 1.442695
    %v608 = vpow.pop %v607
    %v609 = vadd.f32 %v604, 1.0
    %v610 = vadd.f32 %v606, 1.0
    %v611 = vadd.f32 %v608, 1.0
    %v612 = vrcp.pop %v609
    %v613 = vmul.f32 1.0, %v612
    %v614 = vrcp.pop %v610
    %v615 = vmul.f32 1.0, %v614
    %v616 = vrcp.pop %v611
    %v617 = vmul.f32 1.0, %v616
    %v618 = vtanh.pop %v594
    %v619 = vmul.f32 %v615, %v109
    %v620 = vmul.f32 %v613, %v618
    %v621 = vadd.f32 %v619, %v620
    %v622 = vtanh.pop %v621
    %v623 = vmul.f32 %v617, %v622
    %624 = vst [vmem:[#allocation11] sm:$0xff] %v623
    %625 = vst [vmem:[#allocation11 + $0x8] sm:$0xff] %v621
    %s626 = scalar_lea.vmem [#allocation2], 16
    %v627 = vld [vmem:[%s626] sm:$0xff]
    %v628 = vld [vmem:[%s626 + $0x8] sm:$0xff]
    %v629 = vmul.f32 %v627, %v106
    %v630 = vmul.f32 %v628, %v106
    %v631 = vpack.c.bf16 %v623, %v623
    %v632 = vpack.c.bf16 %v629, %v629
    %v633 = vld [vmem:[#allocation7] sm:$0xff]
    %v634 = vld [vmem:[#allocation7 + $0x8] sm:$0xff]
    %v635 = vld [vmem:[#allocation7 + $0x10] sm:$0xff]
    %v636 = vld [vmem:[#allocation7 + $0x18] sm:$0xff]
    %v637 = vld [vmem:[#allocation7 + $0x20] sm:$0xff]
    %v638 = vld [vmem:[#allocation7 + $0x28] sm:$0xff]
    %v639 = vld [vmem:[#allocation7 + $0x30] sm:$0xff]
    %v640 = vld [vmem:[#allocation7 + $0x38] sm:$0xff]
    %v641 = vld [vmem:[#allocation7 + $0x40] sm:$0xff]
    %v642 = vld [vmem:[#allocation7 + $0x48] sm:$0xff]
    %v643 = vld [vmem:[#allocation7 + $0x50] sm:$0xff]
    %v644 = vld [vmem:[#allocation7 + $0x58] sm:$0xff]
    %v645 = vld [vmem:[#allocation7 + $0x60] sm:$0xff]
    %v646 = vld [vmem:[#allocation7 + $0x68] sm:$0xff]
    %v647 = vld [vmem:[#allocation7 + $0x70] sm:$0xff]
    %v648 = vld [vmem:[#allocation7 + $0x78] sm:$0xff]
    %v649 = vld [vmem:[#allocation7 + $0x80] sm:$0xff]
    %v650 = vld [vmem:[#allocation7 + $0x88] sm:$0xff]
    %v651 = vld [vmem:[#allocation7 + $0x90] sm:$0xff]
    %v652 = vld [vmem:[#allocation7 + $0x98] sm:$0xff]
    %v653 = vld [vmem:[#allocation7 + $0xa0] sm:$0xff]
    %v654 = vld [vmem:[#allocation7 + $0xa8] sm:$0xff]
    %v655 = vld [vmem:[#allocation7 + $0xb0] sm:$0xff]
    %v656 = vld [vmem:[#allocation7 + $0xb8] sm:$0xff]
    %v657 = vld [vmem:[#allocation7 + $0xc0] sm:$0xff]
    %v658 = vld [vmem:[#allocation7 + $0xc8] sm:$0xff]
    %v659 = vld [vmem:[#allocation7 + $0xd0] sm:$0xff]
    %v660 = vld [vmem:[#allocation7 + $0xd8] sm:$0xff]
    %v661 = vld [vmem:[#allocation7 + $0xe0] sm:$0xff]
    %v662 = vld [vmem:[#allocation7 + $0xe8] sm:$0xff]
    %v663 = vld [vmem:[#allocation7 + $0xf0] sm:$0xff]
    %v664 = vld [vmem:[#allocation7 + $0xf8] sm:$0xff]
    %v665 = vld [vmem:[#allocation7 + $0x100] sm:$0xff]
    %v666 = vld [vmem:[#allocation7 + $0x108] sm:$0xff]
    %v667 = vld [vmem:[#allocation7 + $0x110] sm:$0xff]
    %v668 = vld [vmem:[#allocation7 + $0x118] sm:$0xff]
    %v669 = vld [vmem:[#allocation7 + $0x120] sm:$0xff]
    %v670 = vld [vmem:[#allocation7 + $0x128] sm:$0xff]
    %v671 = vld [vmem:[#allocation7 + $0x130] sm:$0xff]
    %v672 = vld [vmem:[#allocation7 + $0x138] sm:$0xff]
    %v673 = vld [vmem:[#allocation7 + $0x140] sm:$0xff]
    %v674 = vld [vmem:[#allocation7 + $0x148] sm:$0xff]
    %v675 = vld [vmem:[#allocation7 + $0x150] sm:$0xff]
    %v676 = vld [vmem:[#allocation7 + $0x158] sm:$0xff]
    %v677 = vld [vmem:[#allocation7 + $0x160] sm:$0xff]
    %v678 = vld [vmem:[#allocation7 + $0x168] sm:$0xff]
    %v679 = vld [vmem:[#allocation7 + $0x170] sm:$0xff]
    %v680 = vld [vmem:[#allocation7 + $0x178] sm:$0xff]
    %v681 = vld [vmem:[#allocation7 + $0x180] sm:$0xff]
    %v682 = vld [vmem:[#allocation7 + $0x188] sm:$0xff]
    %v683 = vld [vmem:[#allocation7 + $0x190] sm:$0xff]
    %v684 = vld [vmem:[#allocation7 + $0x198] sm:$0xff]
    %v685 = vld [vmem:[#allocation7 + $0x1a0] sm:$0xff]
    %v686 = vld [vmem:[#allocation7 + $0x1a8] sm:$0xff]
    %v687 = vld [vmem:[#allocation7 + $0x1b0] sm:$0xff]
    %v688 = vld [vmem:[#allocation7 + $0x1b8] sm:$0xff]
    %v689 = vld [vmem:[#allocation7 + $0x1c0] sm:$0xff]
    %v690 = vld [vmem:[#allocation7 + $0x1c8] sm:$0xff]
    %v691 = vld [vmem:[#allocation7 + $0x1d0] sm:$0xff]
    %v692 = vld [vmem:[#allocation7 + $0x1d8] sm:$0xff]
    %v693 = vld [vmem:[#allocation7 + $0x1e0] sm:$0xff]
    %v694 = vld [vmem:[#allocation7 + $0x1e8] sm:$0xff]
    %v695 = vld [vmem:[#allocation7 + $0x1f0] sm:$0xff]
    %v696 = vld [vmem:[#allocation7 + $0x1f8] sm:$0xff]
    %v697 = vld [vmem:[%s6] sm:$0xf]
    %v699 = vlaneseq
    %v700 = vshrl.u32 %v699, 7
    %v701 = vsub.s32 0, %v700
    %v702 = vrot.slane %v697, %v701
    %v703 = vlaneseq
    %v704 = vshrl.u32 %v703, 7
    %v705 = vsub.s32 1, %v704
    %v706 = vrot.slane %v697, %v705
    %v707 = vlaneseq
    %v708 = vshrl.u32 %v707, 7
    %v709 = vsub.s32 2, %v708
    %v710 = vrot.slane %v697, %v709
    %v711 = vlaneseq
    %v712 = vshrl.u32 %v711, 7
    %v713 = vsub.s32 3, %v712
    %v714 = vrot.slane %v697, %v713
    %v783 = vunpack.c.l.b16 %v633
    %v784 = vunpack.c.h.b16 %v633
    %v785 = vunpack.c.l.b16 %v634
    %v786 = vunpack.c.h.b16 %v634
    %v787 = vunpack.c.l.b16 %v635
    %v788 = vunpack.c.h.b16 %v635
    %v789 = vunpack.c.l.b16 %v636
    %v790 = vunpack.c.h.b16 %v636
    %v791 = vunpack.c.l.b16 %v637
    %v792 = vunpack.c.h.b16 %v637
    %v793 = vunpack.c.l.b16 %v638
    %v794 = vunpack.c.h.b16 %v638
    %v795 = vunpack.c.l.b16 %v639
    %v796 = vunpack.c.h.b16 %v639
    %v797 = vunpack.c.l.b16 %v640
    %v798 = vunpack.c.h.b16 %v640
    %v799 = vunpack.c.l.b16 %v641
    %v800 = vunpack.c.h.b16 %v641
    %v801 = vunpack.c.l.b16 %v642
    %v802 = vunpack.c.h.b16 %v642
    %v803 = vunpack.c.l.b16 %v643
    %v804 = vunpack.c.h.b16 %v643
    %v805 = vunpack.c.l.b16 %v644
    %v806 = vunpack.c.h.b16 %v644
    %v807 = vunpack.c.l.b16 %v645
    %v808 = vunpack.c.h.b16 %v645
    %v809 = vunpack.c.l.b16 %v646
    %v810 = vunpack.c.h.b16 %v646
    %v811 = vunpack.c.l.b16 %v647
    %v812 = vunpack.c.h.b16 %v647
    %v813 = vunpack.c.l.b16 %v648
    %v814 = vunpack.c.h.b16 %v648
    %v815 = vunpack.c.l.b16 %v649
    %v816 = vunpack.c.h.b16 %v649
    %v817 = vunpack.c.l.b16 %v650
    %v818 = vunpack.c.h.b16 %v650
    %v819 = vunpack.c.l.b16 %v651
    %v820 = vunpack.c.h.b16 %v651
    %v821 = vunpack.c.l.b16 %v652
    %v822 = vunpack.c.h.b16 %v652
    %v823 = vunpack.c.l.b16 %v653
    %v824 = vunpack.c.h.b16 %v653
    %v825 = vunpack.c.l.b16 %v654
    %v826 = vunpack.c.h.b16 %v654
    %v827 = vunpack.c.l.b16 %v655
    %v828 = vunpack.c.h.b16 %v655
    %v829 = vunpack.c.l.b16 %v656
    %v830 = vunpack.c.h.b16 %v656
    %v831 = vunpack.c.l.b16 %v657
    %v832 = vunpack.c.h.b16 %v657
    %v833 = vunpack.c.l.b16 %v658
    %v834 = vunpack.c.h.b16 %v658
    %v835 = vunpack.c.l.b16 %v659
    %v836 = vunpack.c.h.b16 %v659
    %v837 = vunpack.c.l.b16 %v660
    %v838 = vunpack.c.h.b16 %v660
    %v839 = vunpack.c.l.b16 %v661
    %v840 = vunpack.c.h.b16 %v661
    %v841 = vunpack.c.l.b16 %v662
    %v842 = vunpack.c.h.b16 %v662
    %v843 = vunpack.c.l.b16 %v663
    %v844 = vunpack.c.h.b16 %v663
    %v845 = vunpack.c.l.b16 %v664
    %v846 = vunpack.c.h.b16 %v664
    %v847 = vunpack.c.l.b16 %v665
    %v848 = vunpack.c.h.b16 %v665
    %v849 = vunpack.c.l.b16 %v666
    %v850 = vunpack.c.h.b16 %v666
    %v851 = vunpack.c.l.b16 %v667
    %v852 = vunpack.c.h.b16 %v667
    %v853 = vunpack.c.l.b16 %v668
    %v854 = vunpack.c.h.b16 %v668
    %v855 = vunpack.c.l.b16 %v669
    %v856 = vunpack.c.h.b16 %v669
    %v857 = vunpack.c.l.b16 %v670
    %v858 = vunpack.c.h.b16 %v670
    %v859 = vunpack.c.l.b16 %v671
    %v860 = vunpack.c.h.b16 %v671
    %v861 = vunpack.c.l.b16 %v672
    %v862 = vunpack.c.h.b16 %v672
    %v863 = vunpack.c.l.b16 %v673
    %v864 = vunpack.c.h.b16 %v673
    %v865 = vunpack.c.l.b16 %v674
    %v866 = vunpack.c.h.b16 %v674
    %v867 = vunpack.c.l.b16 %v675
    %v868 = vunpack.c.h.b16 %v675
    %v869 = vunpack.c.l.b16 %v676
    %v870 = vunpack.c.h.b16 %v676
    %v871 = vunpack.c.l.b16 %v677
    %v872 = vunpack.c.h.b16 %v677
    %v873 = vunpack.c.l.b16 %v678
    %v874 = vunpack.c.h.b16 %v678
    %v875 = vunpack.c.l.b16 %v679
    %v876 = vunpack.c.h.b16 %v679
    %v877 = vunpack.c.l.b16 %v680
    %v878 = vunpack.c.h.b16 %v680
    %v879 = vunpack.c.l.b16 %v681
    %v880 = vunpack.c.h.b16 %v681
    %v881 = vunpack.c.l.b16 %v682
    %v882 = vunpack.c.h.b16 %v682
    %v883 = vunpack.c.l.b16 %v683
    %v884 = vunpack.c.h.b16 %v683
    %v885 = vunpack.c.l.b16 %v684
    %v886 = vunpack.c.h.b16 %v684
    %v887 = vunpack.c.l.b16 %v685
    %v888 = vunpack.c.h.b16 %v685
    %v889 = vunpack.c.l.b16 %v686
    %v890 = vunpack.c.h.b16 %v686
    %v891 = vunpack.c.l.b16 %v687
    %v892 = vunpack.c.h.b16 %v687
    %v893 = vunpack.c.l.b16 %v688
    %v894 = vunpack.c.h.b16 %v688
    %v895 = vunpack.c.l.b16 %v689
    %v896 = vunpack.c.h.b16 %v689
    %v897 = vunpack.c.l.b16 %v690
    %v898 = vunpack.c.h.b16 %v690
    %v899 = vunpack.c.l.b16 %v691
    %v900 = vunpack.c.h.b16 %v691
    %v901 = vunpack.c.l.b16 %v692
    %v902 = vunpack.c.h.b16 %v692
    %v903 = vunpack.c.l.b16 %v693
    %v904 = vunpack.c.h.b16 %v693
    %v905 = vunpack.c.l.b16 %v694
    %v906 = vunpack.c.h.b16 %v694
    %v907 = vunpack.c.l.b16 %v695
    %v908 = vunpack.c.h.b16 %v695
    %v909 = vunpack.c.l.b16 %v696
    %v910 = vunpack.c.h.b16 %v696
    %v911 = vpack.c.b16 %v787, %v783
    %v912 = vpack.c.b16 %v788, %v784
    %v913 = vpack.c.b16 %v789, %v785
    %v914 = vpack.c.b16 %v790, %v786
    %v915 = vpack.c.b16 %v795, %v791
    %v916 = vpack.c.b16 %v796, %v792
    %v917 = vpack.c.b16 %v797, %v793
    %v918 = vpack.c.b16 %v798, %v794
    %v919 = vpack.c.b16 %v803, %v799
    %v920 = vpack.c.b16 %v804, %v800
    %v921 = vpack.c.b16 %v805, %v801
    %v922 = vpack.c.b16 %v806, %v802
    %v923 = vpack.c.b16 %v811, %v807
    %v924 = vpack.c.b16 %v812, %v808
    %v925 = vpack.c.b16 %v813, %v809
    %v926 = vpack.c.b16 %v814, %v810
    %v927 = vpack.c.b16 %v819, %v815
    %v928 = vpack.c.b16 %v820, %v816
    %v929 = vpack.c.b16 %v821, %v817
    %v930 = vpack.c.b16 %v822, %v818
    %v931 = vpack.c.b16 %v827, %v823
    %v932 = vpack.c.b16 %v828, %v824
    %v933 = vpack.c.b16 %v829, %v825
    %v934 = vpack.c.b16 %v830, %v826
    %v935 = vpack.c.b16 %v835, %v831
    %v936 = vpack.c.b16 %v836, %v832
    %v937 = vpack.c.b16 %v837, %v833
    %v938 = vpack.c.b16 %v838, %v834
    %v939 = vpack.c.b16 %v843, %v839
    %v940 = vpack.c.b16 %v844, %v840
    %v941 = vpack.c.b16 %v845, %v841
    %v942 = vpack.c.b16 %v846, %v842
    %v943 = vpack.c.b16 %v851, %v847
    %v944 = vpack.c.b16 %v852, %v848
    %v945 = vpack.c.b16 %v853, %v849
    %v946 = vpack.c.b16 %v854, %v850
    %v947 = vpack.c.b16 %v859, %v855
    %v948 = vpack.c.b16 %v860, %v856
    %v949 = vpack.c.b16 %v861, %v857
    %v950 = vpack.c.b16 %v862, %v858
    %v951 = vpack.c.b16 %v867, %v863
    %v952 = vpack.c.b16 %v868, %v864
    %v953 = vpack.c.b16 %v869, %v865
    %v954 = vpack.c.b16 %v870, %v866
    %v955 = vpack.c.b16 %v875, %v871
    %v956 = vpack.c.b16 %v876, %v872
    %v957 = vpack.c.b16 %v877, %v873
    %v958 = vpack.c.b16 %v878, %v874
    %v959 = vpack.c.b16 %v883, %v879
    %v960 = vpack.c.b16 %v884, %v880
    %v961 = vpack.c.b16 %v885, %v881
    %v962 = vpack.c.b16 %v886, %v882
    %v963 = vpack.c.b16 %v891, %v887
    %v964 = vpack.c.b16 %v892, %v888
    %v965 = vpack.c.b16 %v893, %v889
    %v966 = vpack.c.b16 %v894, %v890
    %v967 = vpack.c.b16 %v899, %v895
    %v968 = vpack.c.b16 %v900, %v896
    %v969 = vpack.c.b16 %v901, %v897
    %v970 = vpack.c.b16 %v902, %v898
    %v971 = vpack.c.b16 %v907, %v903
    %v972 = vpack.c.b16 %v908, %v904
    %v973 = vpack.c.b16 %v909, %v905
    %v974 = vpack.c.b16 %v910, %v906
    %1039 = vmatprep.subr.bf16.mxu0 %v912
    %1040 = vmatpush1.bf16.msra.mxu0 %v911
    %1041 = vmatprep.subr.bf16.mxu0 %v916
    %1042 = vmatpush1.bf16.msra.mxu0 %v915
    %1043 = vmatprep.subr.bf16.mxu0 %v920
    %1044 = vmatpush1.bf16.msra.mxu0 %v919
    %1045 = vmatprep.subr.bf16.mxu0 %v924
    %1046 = vmatpush1.bf16.msra.mxu0 %v923
    %1047 = vmatprep.subr.bf16.mxu0 %v928
    %1048 = vmatpush1.bf16.msra.mxu0 %v927
    %1049 = vmatprep.subr.bf16.mxu0 %v932
    %1050 = vmatpush1.bf16.msra.mxu0 %v931
    %1051 = vmatprep.subr.bf16.mxu0 %v936
    %1052 = vmatpush1.bf16.msra.mxu0 %v935
    %1053 = vmatprep.subr.bf16.mxu0 %v940
    %1054 = vmatpush1.bf16.msra.mxu0 %v939
    %1055 = vmatprep.subr.bf16.mxu0 %v944
    %1056 = vmatpush1.bf16.msra.mxu0 %v943
    %1057 = vmatprep.subr.bf16.mxu0 %v948
    %1058 = vmatpush1.bf16.msra.mxu0 %v947
    %1059 = vmatprep.subr.bf16.mxu0 %v952
    %1060 = vmatpush1.bf16.msra.mxu0 %v951
    %1061 = vmatprep.subr.bf16.mxu0 %v956
    %1062 = vmatpush1.bf16.msra.mxu0 %v955
    %1063 = vmatprep.subr.bf16.mxu0 %v960
    %1064 = vmatpush1.bf16.msra.mxu0 %v959
    %1065 = vmatprep.subr.bf16.mxu0 %v964
    %1066 = vmatpush1.bf16.msra.mxu0 %v963
    %1067 = vmatprep.subr.bf16.mxu0 %v968
    %1068 = vmatpush1.bf16.msra.mxu0 %v967
    %1069 = vmatprep.subr.bf16.mxu0 %v972
    %1070 = vmatpush1.bf16.msra.mxu0 %v971
    %1071 = vmatprep.mubr.bf16.mxu0 %v632
    %1072 = vmatmul.mubr.bf16.gmra.mrb[0].mxu0 %v631
    %v1073 = vpop.f32.mrb[0].mxu0
    %v1074 = vadd.f32 %v702, %v1073
    %v1075 = vpop.f32.mrb[0].mxu0
    %v1076 = vadd.f32 %v706, %v1075
    %v1077 = vpop.f32.mrb[0].mxu0
    %v1078 = vpop.f32.mrb[0].mxu0
    %1079 = vdwg.mxu0
    %1080 = vmatprep.subr.bf16.mxu0 %v914
    %1081 = vmatpush1.bf16.msra.mxu0 %v913
    %1082 = vmatprep.subr.bf16.mxu0 %v918
    %1083 = vmatpush1.bf16.msra.mxu0 %v917
    %1084 = vmatprep.subr.bf16.mxu0 %v922
    %1085 = vmatpush1.bf16.msra.mxu0 %v921
    %1086 = vmatprep.subr.bf16.mxu0 %v926
    %1087 = vmatpush1.bf16.msra.mxu0 %v925
    %1088 = vmatprep.subr.bf16.mxu0 %v930
    %1089 = vmatpush1.bf16.msra.mxu0 %v929
    %1090 = vmatprep.subr.bf16.mxu0 %v934
    %1091 = vmatpush1.bf16.msra.mxu0 %v933
    %1092 = vmatprep.subr.bf16.mxu0 %v938
    %1093 = vmatpush1.bf16.msra.mxu0 %v937
    %1094 = vmatprep.subr.bf16.mxu0 %v942
    %1095 = vmatpush1.bf16.msra.mxu0 %v941
    %1096 = vmatprep.subr.bf16.mxu0 %v946
    %1097 = vmatpush1.bf16.msra.mxu0 %v945
    %1098 = vmatprep.subr.bf16.mxu0 %v950
    %1099 = vmatpush1.bf16.msra.mxu0 %v949
    %1100 = vmatprep.subr.bf16.mxu0 %v954
    %1101 = vmatpush1.bf16.msra.mxu0 %v953
    %1102 = vmatprep.subr.bf16.mxu0 %v958
    %1103 = vmatpush1.bf16.msra.mxu0 %v957
    %1104 = vmatprep.subr.bf16.mxu0 %v962
    %1105 = vmatpush1.bf16.msra.mxu0 %v961
    %1106 = vmatprep.subr.bf16.mxu0 %v966
    %1107 = vmatpush1.bf16.msra.mxu0 %v965
    %1108 = vmatprep.subr.bf16.mxu0 %v970
    %1109 = vmatpush1.bf16.msra.mxu0 %v969
    %1110 = vmatprep.subr.bf16.mxu0 %v974
    %1111 = vmatpush1.bf16.msra.mxu0 %v973
    %1112 = vmatprep.mubr.bf16.mxu0 %v632
    %1113 = vmatmul.mubr.bf16.gmra.mrb[0].mxu0 %v631
    %v1114 = vpop.f32.mrb[0].mxu0
    %v1115 = vadd.f32 %v710, %v1114
    %v1116 = vpop.f32.mrb[0].mxu0
    %v1117 = vadd.f32 %v714, %v1116
    %v1118 = vpop.f32.mrb[0].mxu0
    %v1119 = vpop.f32.mrb[0].mxu0
    %1120 = vdwg.mxu0
    %v1121 = vxor.u32 %v1074, 2147483648
    %v1122 = vxor.u32 %v1076, 2147483648
    %v1123 = vxor.u32 %v1117, 2147483648
    %v1124 = vmul.f32 %v1121, 1.442695
    %v1125 = vpow.pop %v1124
    %v1126 = vmul.f32 %v1122, 1.442695
    %v1127 = vpow.pop %v1126
    %v1128 = vmul.f32 %v1123, 1.442695
    %v1129 = vpow.pop %v1128
    %v1130 = vadd.f32 %v1125, 1.0
    %v1131 = vadd.f32 %v1127, 1.0
    %v1132 = vadd.f32 %v1129, 1.0
    %v1133 = vrcp.pop %v1130
    %v1134 = vmul.f32 1.0, %v1133
    %v1135 = vrcp.pop %v1131
    %v1136 = vmul.f32 1.0, %v1135
    %v1137 = vrcp.pop %v1132
    %v1138 = vmul.f32 1.0, %v1137
    %v1139 = vtanh.pop %v1115
    %v1140 = vmul.f32 %v1136, %v630
    %v1141 = vmul.f32 %v1134, %v1139
    %v1142 = vadd.f32 %v1140, %v1141
    %v1143 = vtanh.pop %v1142
    %v1144 = vmul.f32 %v1138, %v1143
    %s1145 = scalar_lea.vmem [#allocation11], 16
    %1146 = vst [vmem:[%s1145] sm:$0xff] %v1144
    %1147 = vst [vmem:[%s1145 + $0x8] sm:$0xff] %v1142
    %v1148 = vpack.c.bf16 %v1144, %v1144
    %v1149 = vld [vmem:[%s7] sm:$0xf]
    %v1150 = vld [vmem:[%s7 + $0x4] sm:$0xf]
    %v1151 = vld [vmem:[%s7 + $0x8] sm:$0xf]
    %v1152 = vld [vmem:[%s7 + $0xc] sm:$0xf]
    %v1153 = vld [vmem:[%s7 + $0x10] sm:$0xf]
    %v1154 = vld [vmem:[%s7 + $0x14] sm:$0xf]
    %v1155 = vld [vmem:[%s7 + $0x18] sm:$0xf]
    %v1156 = vld [vmem:[%s7 + $0x1c] sm:$0xf]
    %v1157 = vld [vmem:[%s7 + $0x20] sm:$0xf]
    %v1158 = vld [vmem:[%s7 + $0x24] sm:$0xf]
    %v1159 = vld [vmem:[%s7 + $0x28] sm:$0xf]
    %v1160 = vld [vmem:[%s7 + $0x2c] sm:$0xf]
    %v1161 = vld [vmem:[%s7 + $0x30] sm:$0xf]
    %v1162 = vld [vmem:[%s7 + $0x34] sm:$0xf]
    %v1163 = vld [vmem:[%s7 + $0x38] sm:$0xf]
    %v1164 = vld [vmem:[%s7 + $0x3c] sm:$0xf]
    %v1165 = vld [vmem:[%s8] sm:$0x1]
    %v1167 = vlaneseq
    %v1168 = vshrl.u32 %v1167, 7
    %v1169 = vsub.s32 0, %v1168
    %v1170 = vrot.slane %v1165, %v1169
    %v1188 = vunpack.c.l.b16 %v1149
    %v1189 = vunpack.c.l.b16 %v1150
    %v1190 = vunpack.c.l.b16 %v1151
    %v1191 = vunpack.c.l.b16 %v1152
    %v1192 = vunpack.c.l.b16 %v1153
    %v1193 = vunpack.c.l.b16 %v1154
    %v1194 = vunpack.c.l.b16 %v1155
    %v1195 = vunpack.c.l.b16 %v1156
    %v1196 = vunpack.c.l.b16 %v1157
    %v1197 = vunpack.c.l.b16 %v1158
    %v1198 = vunpack.c.l.b16 %v1159
    %v1199 = vunpack.c.l.b16 %v1160
    %v1200 = vunpack.c.l.b16 %v1161
    %v1201 = vunpack.c.l.b16 %v1162
    %v1202 = vunpack.c.l.b16 %v1163
    %v1203 = vunpack.c.l.b16 %v1164
    %v1204 = vpack.c.b16 %v1189, %v1188
    %v1205 = vpack.c.b16 %v1191, %v1190
    %v1206 = vpack.c.b16 %v1193, %v1192
    %v1207 = vpack.c.b16 %v1195, %v1194
    %v1208 = vpack.c.b16 %v1197, %v1196
    %v1209 = vpack.c.b16 %v1199, %v1198
    %v1210 = vpack.c.b16 %v1201, %v1200
    %v1211 = vpack.c.b16 %v1203, %v1202
    %1220 = vmatprep.subr.bf16.mxu0 0
    %1221 = vmatpush1.bf16.msra.mxu0 %v1204
    %1222 = vmatprep.subr.bf16.mxu0 0
    %1223 = vmatpush1.bf16.msra.mxu0 %v1205
    %1224 = vmatprep.subr.bf16.mxu0 0
    %1225 = vmatpush1.bf16.msra.mxu0 %v1206
    %1226 = vmatprep.subr.bf16.mxu0 0
    %1227 = vmatpush1.bf16.msra.mxu0 %v1207
    %1228 = vmatprep.subr.bf16.mxu0 0
    %1229 = vmatpush1.bf16.msra.mxu0 %v1208
    %1230 = vmatprep.subr.bf16.mxu0 0
    %1231 = vmatpush1.bf16.msra.mxu0 %v1209
    %1232 = vmatprep.subr.bf16.mxu0 0
    %1233 = vmatpush1.bf16.msra.mxu0 %v1210
    %1234 = vmatprep.subr.bf16.mxu0 0
    %1235 = vmatpush1.bf16.msra.mxu0 %v1211
    %1236 = vmatprep.subr.bf16.mxu0 0
    %1237 = vmatpush1.bf16.msra.mxu0 0
    %1238 = vmatprep.subr.bf16.mxu0 0
    %1239 = vmatpush1.bf16.msra.mxu0 0
    %1240 = vmatprep.subr.bf16.mxu0 0
    %1241 = vmatpush1.bf16.msra.mxu0 0
    %1242 = vmatprep.subr.bf16.mxu0 0
    %1243 = vmatpush1.bf16.msra.mxu0 0
    %1244 = vmatprep.subr.bf16.mxu0 0
    %1245 = vmatpush1.bf16.msra.mxu0 0
    %1246 = vmatprep.subr.bf16.mxu0 0
    %1247 = vmatpush1.bf16.msra.mxu0 0
    %1248 = vmatprep.subr.bf16.mxu0 0
    %1249 = vmatpush1.bf16.msra.mxu0 0
    %1250 = vmatprep.subr.bf16.mxu0 0
    %1251 = vmatpush1.bf16.msra.mxu0 0
    %1252 = vmatprep.mubr.bf16.mxu0 0
    %1253 = vmatmul.mubr.bf16.gmra.mrb[0].mxu0 %v1148
    %v1254 = vpop.f32.mrb[0].mxu0
    %v1255 = vadd.f32 %v1170, %v1254
    %v1256 = vpop.f32.mrb[0].mxu0
    %v1257 = vpop.f32.mrb[0].mxu0
    %v1258 = vpop.f32.mrb[0].mxu0
    %1259 = vdwg.mxu0
    %v1260 = vtanh.pop %v1255
    %v1261 = vpack.c.bf16 %v1260, %v1260
    %v1262 = vld [vmem:[#allocation8] sm:$0xf]
    %v1263 = vld [vmem:[#allocation8 + $0x4] sm:$0xf]
    %v1264 = vld [vmem:[#allocation8 + $0x8] sm:$0xf]
    %v1265 = vld [vmem:[#allocation8 + $0xc] sm:$0xf]
    %v1266 = vld [vmem:[#allocation8 + $0x10] sm:$0xf]
    %v1267 = vld [vmem:[#allocation8 + $0x14] sm:$0xf]
    %v1268 = vld [vmem:[#allocation8 + $0x18] sm:$0xf]
    %v1269 = vld [vmem:[#allocation8 + $0x1c] sm:$0xf]
    %v1270 = vld [vmem:[#allocation8 + $0x20] sm:$0xf]
    %v1271 = vld [vmem:[#allocation8 + $0x24] sm:$0xf]
    %v1272 = vld [vmem:[#allocation8 + $0x28] sm:$0xf]
    %v1273 = vld [vmem:[#allocation8 + $0x2c] sm:$0xf]
    %v1274 = vld [vmem:[#allocation8 + $0x30] sm:$0xf]
    %v1275 = vld [vmem:[#allocation8 + $0x34] sm:$0xf]
    %v1276 = vld [vmem:[#allocation8 + $0x38] sm:$0xf]
    %v1277 = vld [vmem:[#allocation8 + $0x3c] sm:$0xf]
    %v1278 = vld [vmem:[%s10] sm:$0x1]
    %v1280 = vlaneseq
    %v1281 = vshrl.u32 %v1280, 7
    %v1282 = vsub.s32 0, %v1281
    %v1283 = vrot.slane %v1278, %v1282
    %v1301 = vunpack.c.l.b16 %v1262
    %v1302 = vunpack.c.l.b16 %v1263
    %v1303 = vunpack.c.l.b16 %v1264
    %v1304 = vunpack.c.l.b16 %v1265
    %v1305 = vunpack.c.l.b16 %v1266
    %v1306 = vunpack.c.l.b16 %v1267
    %v1307 = vunpack.c.l.b16 %v1268
    %v1308 = vunpack.c.l.b16 %v1269
    %v1309 = vunpack.c.l.b16 %v1270
    %v1310 = vunpack.c.l.b16 %v1271
    %v1311 = vunpack.c.l.b16 %v1272
    %v1312 = vunpack.c.l.b16 %v1273
    %v1313 = vunpack.c.l.b16 %v1274
    %v1314 = vunpack.c.l.b16 %v1275
    %v1315 = vunpack.c.l.b16 %v1276
    %v1316 = vunpack.c.l.b16 %v1277
    %v1317 = vpack.c.b16 %v1302, %v1301
    %v1318 = vpack.c.b16 %v1304, %v1303
    %v1319 = vpack.c.b16 %v1306, %v1305
    %v1320 = vpack.c.b16 %v1308, %v1307
    %v1321 = vpack.c.b16 %v1310, %v1309
    %v1322 = vpack.c.b16 %v1312, %v1311
    %v1323 = vpack.c.b16 %v1314, %v1313
    %v1324 = vpack.c.b16 %v1316, %v1315
    %1333 = vmatprep.subr.bf16.mxu0 0
    %1334 = vmatpush1.bf16.msra.mxu0 %v1317
    %1335 = vmatprep.subr.bf16.mxu0 0
    %1336 = vmatpush1.bf16.msra.mxu0 %v1318
    %1337 = vmatprep.subr.bf16.mxu0 0
    %1338 = vmatpush1.bf16.msra.mxu0 %v1319
    %1339 = vmatprep.subr.bf16.mxu0 0
    %1340 = vmatpush1.bf16.msra.mxu0 %v1320
    %1341 = vmatprep.subr.bf16.mxu0 0
    %1342 = vmatpush1.bf16.msra.mxu0 %v1321
    %1343 = vmatprep.subr.bf16.mxu0 0
    %1344 = vmatpush1.bf16.msra.mxu0 %v1322
    %1345 = vmatprep.subr.bf16.mxu0 0
    %1346 = vmatpush1.bf16.msra.mxu0 %v1323
    %1347 = vmatprep.subr.bf16.mxu0 0
    %1348 = vmatpush1.bf16.msra.mxu0 %v1324
    %1349 = vmatprep.subr.bf16.mxu0 0
    %1350 = vmatpush1.bf16.msra.mxu0 0
    %1351 = vmatprep.subr.bf16.mxu0 0
    %1352 = vmatpush1.bf16.msra.mxu0 0
    %1353 = vmatprep.subr.bf16.mxu0 0
    %1354 = vmatpush1.bf16.msra.mxu0 0
    %1355 = vmatprep.subr.bf16.mxu0 0
    %1356 = vmatpush1.bf16.msra.mxu0 0
    %1357 = vmatprep.subr.bf16.mxu0 0
    %1358 = vmatpush1.bf16.msra.mxu0 0
    %1359 = vmatprep.subr.bf16.mxu0 0
    %1360 = vmatpush1.bf16.msra.mxu0 0
    %1361 = vmatprep.subr.bf16.mxu0 0
    %1362 = vmatpush1.bf16.msra.mxu0 0
    %1363 = vmatprep.subr.bf16.mxu0 0
    %1364 = vmatpush1.bf16.msra.mxu0 0
    %1365 = vmatprep.mubr.bf16.mxu0 0
    %1366 = vmatmul.mubr.bf16.gmra.mrb[0].mxu0 %v1261
    %v1367 = vpop.f32.mrb[0].mxu0
    %v1368 = vadd.f32 %v1283, %v1367
    %v1369 = vpop.f32.mrb[0].mxu0
    %v1370 = vpop.f32.mrb[0].mxu0
    %v1371 = vpop.f32.mrb[0].mxu0
    %1372 = vdwg.mxu0
    %1373 = vst [vmem:[#allocation10] sm:$0xff] %v1368
    // Predicated region
    $region62: #{tpu_custom_call.1} parent=1 // pred_check
      _
    $region63: #{tpu_custom_call.1} parent=1 // pred_check_branch
      %1375 = sbr.rel (0) target = $region65
    $region64: #{tpu_custom_call.1} parent=1 // pred_region
      %s1377 = ssub.s32 128, 128
      %1378 = vsyncadd [#allocation4], %s1377
      %s1380 = sshll.u32 [#allocation10], 4
      %s1381 = int_to_ptr.vmem [resolvable:$true] %s1380
      %1383 = dma.vmem_to_hbm [thread:$0]  %s1381, 128, %s11, [#allocation4]
    $region65: #{tpu_custom_call.1} parent=1 // pred_fallthru
      _
    // Predicated region
    $region66: #{tpu_custom_call.1} parent=1 // pred_check
      _
    $region67: #{tpu_custom_call.1} parent=1 // pred_check_branch
      %1385 = sbr.rel (0) target = $region69
    $region68: #{tpu_custom_call.1} parent=1 // pred_region
      %s1387 = ssub.s32 512, 512
      %1388 = vsyncadd [#allocation12], %s1387
      %s1389 = sshll.u32 [#allocation11], 4
      %s1390 = int_to_ptr.vmem [resolvable:$true] %s1389
      %1395 = dma.vmem_to_hbm [thread:$0]  %s1390, 512, %s12, [#allocation12], 256, 256, 16
    $region69: #{tpu_custom_call.1} parent=1 // pred_fallthru
      _
    // Predicated region
    $region70: #{tpu_custom_call.1} parent=1 // pred_check
      _
    $region71: #{tpu_custom_call.1} parent=1 // pred_check_branch
      %1397 = sbr.rel (0) target = $region73
    $region72: #{tpu_custom_call.1} parent=1 // pred_region
      %1398 = dma.done [#allocation4], 128
    $region73: #{tpu_custom_call.1} parent=1 // pred_fallthru
      _
    // Predicated region
    $region74: #{tpu_custom_call.1} parent=1 // pred_check
      _
    $region75: #{tpu_custom_call.1} parent=1 // pred_check_branch
      %1400 = sbr.rel (0) target = $region77
    $region76: #{tpu_custom_call.1} parent=1 // pred_region
      %1401 = dma.done [#allocation12], 512
    $region77: #{tpu_custom_call.1} parent=1 // pred_fallthru
      _
    %1402 = vsyncpa [#allocation3], 1
    %1403 = vsyncpa [#allocation6], 1
    %1404 = vsyncpa [#allocation9], 1
    %1405 = vsyncpa [#allocation4], 1
    %1406 = vsyncpa [#allocation12], 1

</llo_original>
